<compile_context>
chip_gen: v6e
topology: v6e:2x2x1
jax: 0.10.0
libtpu: 0.0.40
codegen_flags: <defaults>
</compile_context>

<pallas_src>
import functools
import math

import jax
import jax.numpy as jnp
import numpy as np
from jax.experimental import pallas as pl
from jax.experimental.pallas import tpu as pltpu

LN_EPS = 1e-5


def _gelu(x):
    # tanh-approximation GELU (EUP tanh on TPU)
    c = math.sqrt(2.0 / math.pi)
    return 0.5 * x * (1.0 + jnp.tanh(c * (x + 0.044715 * x * x * x)))


def _layernorm(x, gamma, beta):
    mu = jnp.mean(x, axis=-1, keepdims=True)
    var = jnp.mean((x - mu) ** 2, axis=-1, keepdims=True)
    return (x - mu) / jnp.sqrt(var + LN_EPS) * gamma + beta


def _bf16(x):
    return x.astype(jnp.bfloat16)


# --------------------------------------------------------------------------
# Fused kernel: (encoder + lm-head transform + mean-pool) on grid step 0,
# then per-step vocab tile projection + sigmoid + fused BCE.
# --------------------------------------------------------------------------
def fused_forward_kernel(x_ref, wq_ref, bq_ref, wk_ref, bk_ref, wv_ref, bv_ref,
                         wo_ref, bo_ref, w1_ref, b1_ref, w2_ref, b2_ref, ln_ref,
                         wh_ref, bh_ref, labels_ref, wdec_ref, bdec_ref,
                         probs_ref, loss_ref,
                         pooled_sc, acc_sc, *, vocab_size):
    j = pl.program_id(0)
    nj = pl.num_programs(0)
    B, S, H = x_ref.shape

    # ---- step 0 only: encoder layer + RoBERTa lm_head transform + pool ----
    @pl.when(j == 0)
    def _():
        x = x_ref[...].astype(jnp.float32)                   # (B, S, H)
        xf = x.reshape(B * S, H)
        xb = _bf16(xf)

        q = (jnp.dot(xb, wq_ref[...], preferred_element_type=jnp.float32)
             + bq_ref[...]).reshape(B, S, H)
        k = (jnp.dot(xb, wk_ref[...], preferred_element_type=jnp.float32)
             + bk_ref[...]).reshape(B, S, H)
        v = (jnp.dot(xb, wv_ref[...], preferred_element_type=jnp.float32)
             + bv_ref[...]).reshape(B, S, H)

        scores = jnp.einsum('bqd,bkd->bqk', _bf16(q), _bf16(k),
                            preferred_element_type=jnp.float32) * (1.0 / math.sqrt(H))
        scores = scores - jnp.max(scores, axis=-1, keepdims=True)
        p = jnp.exp(scores)
        attn = p / jnp.sum(p, axis=-1, keepdims=True)
        ctx = jnp.einsum('bqk,bkd->bqd', _bf16(attn), _bf16(v),
                         preferred_element_type=jnp.float32).reshape(B * S, H)
        attn_out = jnp.dot(_bf16(ctx), wo_ref[...],
                           preferred_element_type=jnp.float32) + bo_ref[...]

        y = _layernorm(xf + attn_out, ln_ref[0], ln_ref[1])

        h1 = _gelu(jnp.dot(_bf16(y), w1_ref[...],
                           preferred_element_type=jnp.float32) + b1_ref[...])
        h2 = jnp.dot(_bf16(h1), w2_ref[...],
                     preferred_element_type=jnp.float32) + b2_ref[...]
        z = _layernorm(y + h2, ln_ref[2], ln_ref[3])

        # RoBERTa lm_head transform: dense -> gelu -> layernorm
        d = _gelu(jnp.dot(_bf16(z), wh_ref[...],
                          preferred_element_type=jnp.float32) + bh_ref[...])
        d = _layernorm(d, ln_ref[4], ln_ref[5])              # (B*S, H)

        # Mean over the sequence BEFORE the vocab projection (commutes with Wdec).
        pooled = jnp.mean(d.reshape(B, S, H), axis=1)        # (B, H)
        pooled_sc[...] = pooled.astype(pooled_sc.dtype)      # bf16 scratch
        acc_sc[...] = jnp.zeros_like(acc_sc)

    # ---- every step: one vocab tile -> sigmoid -> fused BCE partials ----
    Vt = wdec_ref.shape[1]
    pooled_bf = pooled_sc[...]                               # (B, H) bf16
    logits = jnp.dot(pooled_bf, wdec_ref[...],
                     preferred_element_type=jnp.float32) + bdec_ref[...]   # (B, Vt)
    probs = jax.nn.sigmoid(logits)
    probs_ref[...] = probs.astype(probs_ref.dtype)

    # Multi-hot slab for this vocab tile: running max over L keeps only a
    # (B, Vt) intermediate live (no (B, L, Vt) 3-D blow-up).
    labs = labels_ref[...]                                   # (B, L) int32
    L = labs.shape[1]
    ids = j * Vt + jax.lax.broadcasted_iota(jnp.int32, (B, Vt), 1)
    y = jnp.zeros((B, Vt), jnp.float32)
    for l in range(L):
        y = jnp.maximum(y, (ids == labs[:, l:l + 1]).astype(jnp.float32))
    y = jnp.where(ids < 3, 0.0, y)                           # labels[:, 0:3] = 0

    # BCE with log clamped at -100 (matches torch.nn.BCELoss semantics).
    logp = jnp.maximum(jnp.log(probs), -100.0)
    log1mp = jnp.maximum(jnp.log(1.0 - probs), -100.0)
    acc_sc[...] += -(y * logp + (1.0 - y) * log1mp)

    @pl.when(j == nj - 1)
    def _():
        denom = jnp.float32(B * vocab_size)
        loss_ref[...] = jnp.sum(acc_sc[...], axis=(0, 1), keepdims=True) / denom


def run_fused_forward(x, labels, p, vt):
    B, S, H = x.shape
    IM = p["w1"].shape[1]
    V = p["wdec"].shape[1]
    L = labels.shape[1]
    assert V % vt == 0, "vocab size must be a multiple of the vocab tile"
    nj = V // vt

    kernel = functools.partial(fused_forward_kernel, vocab_size=V)

    probs, loss = pl.pallas_call(
        kernel,
        out_shape=(jax.ShapeDtypeStruct((B, V), jnp.float32),
                   jax.ShapeDtypeStruct((1, 1), jnp.float32)),
        grid=(nj,),
        in_specs=[
            pl.BlockSpec((B, S, H), lambda j: (0, 0, 0)),     # x
            pl.BlockSpec((H, H), lambda j: (0, 0)),           # wq
            pl.BlockSpec((1, H), lambda j: (0, 0)),           # bq
            pl.BlockSpec((H, H), lambda j: (0, 0)),           # wk
            pl.BlockSpec((1, H), lambda j: (0, 0)),           # bk
            pl.BlockSpec((H, H), lambda j: (0, 0)),           # wv
            pl.BlockSpec((1, H), lambda j: (0, 0)),           # bv
            pl.BlockSpec((H, H), lambda j: (0, 0)),           # wo
            pl.BlockSpec((1, H), lambda j: (0, 0)),           # bo
            pl.BlockSpec((H, IM), lambda j: (0, 0)),          # w1
            pl.BlockSpec((1, IM), lambda j: (0, 0)),          # b1
            pl.BlockSpec((IM, H), lambda j: (0, 0)),          # w2
            pl.BlockSpec((1, H), lambda j: (0, 0)),           # b2
            pl.BlockSpec((6, 1, H), lambda j: (0, 0, 0)),     # ln params
            pl.BlockSpec((H, H), lambda j: (0, 0)),           # wh (lm_head dense)
            pl.BlockSpec((1, H), lambda j: (0, 0)),           # bh
            pl.BlockSpec((B, L), lambda j: (0, 0)),           # labels
            pl.BlockSpec((H, vt), lambda j: (0, j)),          # wdec (streamed once)
            pl.BlockSpec((1, vt), lambda j: (0, j)),          # bdec
        ],
        out_specs=(pl.BlockSpec((B, vt), lambda j: (0, j)),   # probs
                   pl.BlockSpec((1, 1), lambda j: (0, 0))),   # loss
        scratch_shapes=[pltpu.VMEM((B, H), jnp.bfloat16),     # pooled hidden
                        pltpu.VMEM((B, vt), jnp.float32)],    # BCE partials
        compiler_params=pltpu.CompilerParams(
            dimension_semantics=("arbitrary",),
            vmem_limit_bytes=32 * 1024 * 1024),
    )(x, p["wq"], p["bq"], p["wk"], p["bk"], p["wv"], p["bv"],
      p["wo"], p["bo"], p["w1"], p["b1"], p["w2"], p["b2"], p["ln"],
      p["wh"], p["bh"], labels, p["wdec"], p["bdec"])
    return probs, loss[0, 0]


# --------------------------------------------------------------------------
# Wrapper (equivalent of InversionPLMMLC.forward)
# --------------------------------------------------------------------------
@functools.partial(jax.jit, static_argnames=("vt",))
def inversion_plm_mlc_forward(x, labels, params, vt=512):
    return run_fused_forward(x, labels, params, vt=vt)


# --------------------------------------------------------------------------
# Deterministic synthetic parameters (one roberta-like layer + lm_head).
# Matmul weights stored in bf16; biases / LN params in f32.
# TODO(synk): pretrained roberta-base weights (AutoModelForMaskedLM) cannot be
#             loaded in-script; a structurally identical synthetic encoder is
#             used instead.
# --------------------------------------------------------------------------
def init_params(key, H, IM, V):
    ks = jax.random.split(key, 16)
    s = 0.02

    def w(k, shape):
        return (s * jax.random.normal(k, shape, jnp.float32)).astype(jnp.bfloat16)

    gam = 1.0 + 0.05 * jax.random.normal(ks[12], (3, 1, H), jnp.float32)
    bet = 0.05 * jax.random.normal(ks[13], (3, 1, H), jnp.float32)
    ln = jnp.stack([gam[0], bet[0], gam[1], bet[1], gam[2], bet[2]], axis=0)  # (6,1,H)
    return dict(
        wq=w(ks[0], (H, H)), bq=s * jax.random.normal(ks[1], (1, H), jnp.float32),
        wk=w(ks[2], (H, H)), bk=s * jax.random.normal(ks[3], (1, H), jnp.float32),
        wv=w(ks[4], (H, H)), bv=s * jax.random.normal(ks[5], (1, H), jnp.float32),
        wo=w(ks[6], (H, H)), bo=s * jax.random.normal(ks[7], (1, H), jnp.float32),
        w1=w(ks[8], (H, IM)), b1=s * jax.random.normal(ks[9], (1, IM), jnp.float32),
        w2=w(ks[10], (IM, H)), b2=s * jax.random.normal(ks[11], (1, H), jnp.float32),
        ln=ln,
        wh=w(ks[14], (H, H)), bh=jnp.zeros((1, H), jnp.float32),
        wdec=w(ks[15], (H, V)), bdec=jnp.zeros((1, V), jnp.float32),
    )


# --------------------------------------------------------------------------
# Pure-JAX reference (same synthetic model, same bf16-in/f32-accum matmuls).
# Pool-before-project is mathematically identical to mean(logits, dim=1).
# --------------------------------------------------------------------------
def reference(x, labels, p):
    B, S, H = x.shape
    V = p["wdec"].shape[1]
    xf = x.reshape(B * S, H).astype(jnp.float32)
    xb = _bf16(xf)

    q = (jnp.dot(xb, p["wq"], preferred_element_type=jnp.float32) + p["bq"]).reshape(B, S, H)
    k = (jnp.dot(xb, p["wk"], preferred_element_type=jnp.float32) + p["bk"]).reshape(B, S, H)
    v = (jnp.dot(xb, p["wv"], preferred_element_type=jnp.float32) + p["bv"]).reshape(B, S, H)
    sc = jnp.einsum('bqd,bkd->bqk', _bf16(q), _bf16(k),
                    preferred_element_type=jnp.float32) * (1.0 / math.sqrt(H))
    sc = sc - sc.max(-1, keepdims=True)
    a = jnp.exp(sc)
    a = a / a.sum(-1, keepdims=True)
    ctx = jnp.einsum('bqk,bkd->bqd', _bf16(a), _bf16(v),
                     preferred_element_type=jnp.float32).reshape(B * S, H)
    ao = jnp.dot(_bf16(ctx), p["wo"], preferred_element_type=jnp.float32) + p["bo"]
    y = _layernorm(xf + ao, p["ln"][0], p["ln"][1])
    h1 = _gelu(jnp.dot(_bf16(y), p["w1"], preferred_element_type=jnp.float32) + p["b1"])
    h2 = jnp.dot(_bf16(h1), p["w2"], preferred_element_type=jnp.float32) + p["b2"]
    z = _layernorm(y + h2, p["ln"][2], p["ln"][3])
    d = _gelu(jnp.dot(_bf16(z), p["wh"], preferred_element_type=jnp.float32) + p["bh"])
    d = _layernorm(d, p["ln"][4], p["ln"][5])

    pooled = jnp.mean(d.reshape(B, S, H), axis=1)
    logits = jnp.dot(_bf16(pooled), p["wdec"],
                     preferred_element_type=jnp.float32) + p["bdec"]
    probs = jax.nn.sigmoid(logits)

    y_mh = jnp.zeros((B, V), jnp.float32).at[jnp.arange(B)[:, None], labels].set(1.0)
    y_mh = y_mh.at[:, 0:3].set(0.0)
    logp = jnp.maximum(jnp.log(probs), -100.0)
    log1 = jnp.maximum(jnp.log(1.0 - probs), -100.0)
    loss = jnp.mean(-(y_mh * logp + (1.0 - y_mh) * log1))
    return probs, loss


if __name__ == "__main__":
    B, S, H, IM, V = 2, 8, 32, 128, 512   # bsz, seq_len, hid_dim, ffn_dim, vocab_size
    VT = 512                               # vocab tile: V=512 -> single grid step

    key = jax.random.PRNGKey(0)
    kx, kl, kp = jax.random.split(key, 3)
    x = jax.random.normal(kx, (B, S, H), jnp.float32)
    labels = jax.random.randint(kl, (B, S), 0, V, dtype=jnp.int32)
    params = init_params(kp, H, IM, V)

    probs, loss = inversion_plm_mlc_forward(x, labels, params, vt=VT)
    jax.block_until_ready((probs, loss))

    probs_ref, loss_ref = reference(x, labels, params)
    np.testing.assert_allclose(np.asarray(probs), np.asarray(probs_ref),
                               rtol=2e-3, atol=2e-4)
    np.testing.assert_allclose(np.asarray(loss), np.asarray(loss_ref),
                               rtol=2e-3, atol=2e-4)
    print("KERNEL_OK")
</pallas_src>

<mosaic_0001>
module attributes {stable_mosaic.version = 11 : i64} {
  func.func @fused_forward_kernel(%arg0: i32, %arg1: memref<2x8x32xf32, #tpu.memory_space<vmem>>, %arg2: memref<32x32xbf16, #tpu.memory_space<vmem>>, %arg3: memref<1x32xf32, #tpu.memory_space<vmem>>, %arg4: memref<32x32xbf16, #tpu.memory_space<vmem>>, %arg5: memref<1x32xf32, #tpu.memory_space<vmem>>, %arg6: memref<32x32xbf16, #tpu.memory_space<vmem>>, %arg7: memref<1x32xf32, #tpu.memory_space<vmem>>, %arg8: memref<32x32xbf16, #tpu.memory_space<vmem>>, %arg9: memref<1x32xf32, #tpu.memory_space<vmem>>, %arg10: memref<32x128xbf16, #tpu.memory_space<vmem>>, %arg11: memref<1x128xf32, #tpu.memory_space<vmem>>, %arg12: memref<128x32xbf16, #tpu.memory_space<vmem>>, %arg13: memref<1x32xf32, #tpu.memory_space<vmem>>, %arg14: memref<6x1x32xf32, #tpu.memory_space<vmem>>, %arg15: memref<32x32xbf16, #tpu.memory_space<vmem>>, %arg16: memref<1x32xf32, #tpu.memory_space<vmem>>, %arg17: memref<2x8xi32, #tpu.memory_space<vmem>>, %arg18: memref<32x512xbf16, #tpu.memory_space<vmem>>, %arg19: memref<1x512xf32, #tpu.memory_space<vmem>>, %arg20: memref<2x512xf32, #tpu.memory_space<vmem>>, %arg21: memref<1x1xf32, #tpu.memory_space<vmem>>, %arg22: memref<2x32xbf16, #tpu.memory_space<vmem>>, %arg23: memref<2x512xf32, #tpu.memory_space<vmem>>) attributes {dimension_semantics = [#tpu.dimension_semantics<arbitrary>], iteration_bounds = array<i64: 1>, scalar_prefetch = 0 : i64, scratch_operands = 2 : i64, tpu.core_type = #tpu.core_type<tc>, window_params = [{pipeline_mode = #tpu.pipeline_mode<synchronous>, transform_indices = @transform_0, window_bounds = array<i64: 2, 8, 32>}, {pipeline_mode = #tpu.pipeline_mode<synchronous>, transform_indices = @transform_1, window_bounds = array<i64: 32, 32>}, {pipeline_mode = #tpu.pipeline_mode<synchronous>, transform_indices = @transform_2, window_bounds = array<i64: 1, 32>}, {pipeline_mode = #tpu.pipeline_mode<synchronous>, transform_indices = @transform_3, window_bounds = array<i64: 32, 32>}, {pipeline_mode = #tpu.pipeline_mode<synchronous>, transform_indices = @transform_4, window_bounds = array<i64: 1, 32>}, {pipeline_mode = #tpu.pipeline_mode<synchronous>, transform_indices = @transform_5, window_bounds = array<i64: 32, 32>}, {pipeline_mode = #tpu.pipeline_mode<synchronous>, transform_indices = @transform_6, window_bounds = array<i64: 1, 32>}, {pipeline_mode = #tpu.pipeline_mode<synchronous>, transform_indices = @transform_7, window_bounds = array<i64: 32, 32>}, {pipeline_mode = #tpu.pipeline_mode<synchronous>, transform_indices = @transform_8, window_bounds = array<i64: 1, 32>}, {pipeline_mode = #tpu.pipeline_mode<synchronous>, transform_indices = @transform_9, window_bounds = array<i64: 32, 128>}, {pipeline_mode = #tpu.pipeline_mode<synchronous>, transform_indices = @transform_10, window_bounds = array<i64: 1, 128>}, {pipeline_mode = #tpu.pipeline_mode<synchronous>, transform_indices = @transform_11, window_bounds = array<i64: 128, 32>}, {pipeline_mode = #tpu.pipeline_mode<synchronous>, transform_indices = @transform_12, window_bounds = array<i64: 1, 32>}, {pipeline_mode = #tpu.pipeline_mode<synchronous>, transform_indices = @transform_13, window_bounds = array<i64: 6, 1, 32>}, {pipeline_mode = #tpu.pipeline_mode<synchronous>, transform_indices = @transform_14, window_bounds = array<i64: 32, 32>}, {pipeline_mode = #tpu.pipeline_mode<synchronous>, transform_indices = @transform_15, window_bounds = array<i64: 1, 32>}, {pipeline_mode = #tpu.pipeline_mode<synchronous>, transform_indices = @transform_16, window_bounds = array<i64: 2, 8>}, {transform_indices = @transform_17, window_bounds = array<i64: 32, 512>}, {transform_indices = @transform_18, window_bounds = array<i64: 1, 512>}, {transform_indices = @transform_19, window_bounds = array<i64: 2, 512>}, {pipeline_mode = #tpu.pipeline_mode<synchronous>, transform_indices = @transform_20, window_bounds = array<i64: 1, 1>}]} {
    %c0_i32 = arith.constant 0 : i32
    %0 = arith.cmpi eq, %arg0, %c0_i32 : i32
    %1 = arith.extui %0 : i1 to i32
    %c0_i32_0 = arith.constant 0 : i32
    %2 = arith.cmpi ne, %1, %c0_i32_0 : i32
    scf.if %2 {
      %c0_24 = arith.constant 0 : index
      %c0_25 = arith.constant 0 : index
      %c0_26 = arith.constant 0 : index
      %94 = vector.load %arg1[%c0_24, %c0_25, %c0_26] : memref<2x8x32xf32, #tpu.memory_space<vmem>>, vector<2x8x32xf32>
      %95 = vector.shape_cast %94 : vector<2x8x32xf32> to vector<16x32xf32>
      %96 = arith.truncf %95 : vector<16x32xf32> to vector<16x32xbf16>
      %c0_27 = arith.constant 0 : index
      %c0_28 = arith.constant 0 : index
      %97 = vector.load %arg2[%c0_27, %c0_28] : memref<32x32xbf16, #tpu.memory_space<vmem>>, vector<32x32xbf16>
      %cst_29 = arith.constant dense<0.000000e+00> : vector<16x32xf32>
      %98 = tpu.matmul %96, %97, %cst_29 {dimension_numbers = #tpu.dot_dimension_numbers<[1], [0], [0], [1], [0, 0, 1, 1], [], []>} : vector<16x32xbf16>, vector<32x32xbf16>, vector<16x32xf32> -> vector<16x32xf32>
      %c0_30 = arith.constant 0 : index
      %c0_31 = arith.constant 0 : index
      %99 = vector.load %arg3[%c0_30, %c0_31] : memref<1x32xf32, #tpu.memory_space<vmem>>, vector<1x32xf32>
      %100 = vector.broadcast %99 : vector<1x32xf32> to vector<16x32xf32>
      %101 = arith.addf %98, %100 : vector<16x32xf32>
      %102 = vector.shape_cast %101 : vector<16x32xf32> to vector<2x8x32xf32>
      %c0_32 = arith.constant 0 : index
      %c0_33 = arith.constant 0 : index
      %103 = vector.load %arg4[%c0_32, %c0_33] : memref<32x32xbf16, #tpu.memory_space<vmem>>, vector<32x32xbf16>
      %cst_34 = arith.constant dense<0.000000e+00> : vector<16x32xf32>
      %104 = tpu.matmul %96, %103, %cst_34 {dimension_numbers = #tpu.dot_dimension_numbers<[1], [0], [0], [1], [0, 0, 1, 1], [], []>} : vector<16x32xbf16>, vector<32x32xbf16>, vector<16x32xf32> -> vector<16x32xf32>
      %c0_35 = arith.constant 0 : index
      %c0_36 = arith.constant 0 : index
      %105 = vector.load %arg5[%c0_35, %c0_36] : memref<1x32xf32, #tpu.memory_space<vmem>>, vector<1x32xf32>
      %106 = vector.broadcast %105 : vector<1x32xf32> to vector<16x32xf32>
      %107 = arith.addf %104, %106 : vector<16x32xf32>
      %108 = vector.shape_cast %107 : vector<16x32xf32> to vector<2x8x32xf32>
      %c0_37 = arith.constant 0 : index
      %c0_38 = arith.constant 0 : index
      %109 = vector.load %arg6[%c0_37, %c0_38] : memref<32x32xbf16, #tpu.memory_space<vmem>>, vector<32x32xbf16>
      %cst_39 = arith.constant dense<0.000000e+00> : vector<16x32xf32>
      %110 = tpu.matmul %96, %109, %cst_39 {dimension_numbers = #tpu.dot_dimension_numbers<[1], [0], [0], [1], [0, 0, 1, 1], [], []>} : vector<16x32xbf16>, vector<32x32xbf16>, vector<16x32xf32> -> vector<16x32xf32>
      %c0_40 = arith.constant 0 : index
      %c0_41 = arith.constant 0 : index
      %111 = vector.load %arg7[%c0_40, %c0_41] : memref<1x32xf32, #tpu.memory_space<vmem>>, vector<1x32xf32>
      %112 = vector.broadcast %111 : vector<1x32xf32> to vector<16x32xf32>
      %113 = arith.addf %110, %112 : vector<16x32xf32>
      %114 = vector.shape_cast %113 : vector<16x32xf32> to vector<2x8x32xf32>
      %115 = arith.truncf %102 : vector<2x8x32xf32> to vector<2x8x32xbf16>
      %116 = arith.truncf %108 : vector<2x8x32xf32> to vector<2x8x32xbf16>
      "tpu.trace_start"() <{level = 10 : i32, message = "bqd,bkd->bqk"}> : () -> ()
      %cst_42 = arith.constant dense<0.000000e+00> : vector<2x8x8xf32>
      %117 = tpu.matmul %115, %116, %cst_42 {dimension_numbers = #tpu.dot_dimension_numbers<[2], [2], [1], [1], [0, 0, 0, 1, 1, 1], [0], [0]>} : vector<2x8x32xbf16>, vector<2x8x32xbf16>, vector<2x8x8xf32> -> vector<2x8x8xf32>
      "tpu.trace_stop"() : () -> ()
      %cst_43 = arith.constant 0.176776692 : f32
      %118 = vector.broadcast %cst_43 : f32 to vector<2x8x8xf32>
      %119 = arith.mulf %117, %118 : vector<2x8x8xf32>
      %cst_44 = arith.constant dense<0xFF800000> : vector<2x8xf32>
      %120 = vector.multi_reduction <maximumf>, %119, %cst_44 [2] : vector<2x8x8xf32> to vector<2x8xf32>
      %121 = vector.shape_cast %120 : vector<2x8xf32> to vector<2x8x1xf32>
      %122 = vector.broadcast %121 : vector<2x8x1xf32> to vector<2x8x8xf32>
      %123 = arith.subf %119, %122 : vector<2x8x8xf32>
      %124 = math.exp %123 : vector<2x8x8xf32>
      %cst_45 = arith.constant dense<0.000000e+00> : vector<2x8xf32>
      %125 = vector.multi_reduction <add>, %124, %cst_45 [2] : vector<2x8x8xf32> to vector<2x8xf32>
      %126 = vector.shape_cast %125 : vector<2x8xf32> to vector<2x8x1xf32>
      %127 = vector.broadcast %126 : vector<2x8x1xf32> to vector<2x8x8xf32>
      %128 = arith.divf %124, %127 : vector<2x8x8xf32>
      %129 = arith.truncf %128 : vector<2x8x8xf32> to vector<2x8x8xbf16>
      %130 = arith.truncf %114 : vector<2x8x32xf32> to vector<2x8x32xbf16>
      "tpu.trace_start"() <{level = 10 : i32, message = "bqk,bkd->bqd"}> : () -> ()
      %cst_46 = arith.constant dense<0.000000e+00> : vector<2x8x32xf32>
      %131 = tpu.matmul %129, %130, %cst_46 {dimension_numbers = #tpu.dot_dimension_numbers<[2], [1], [1], [2], [0, 0, 0, 1, 1, 2], [0], [0]>} : vector<2x8x8xbf16>, vector<2x8x32xbf16>, vector<2x8x32xf32> -> vector<2x8x32xf32>
      "tpu.trace_stop"() : () -> ()
      %132 = vector.shape_cast %131 : vector<2x8x32xf32> to vector<16x32xf32>
      %133 = arith.truncf %132 : vector<16x32xf32> to vector<16x32xbf16>
      %c0_47 = arith.constant 0 : index
      %c0_48 = arith.constant 0 : index
      %134 = vector.load %arg8[%c0_47, %c0_48] : memref<32x32xbf16, #tpu.memory_space<vmem>>, vector<32x32xbf16>
      %cst_49 = arith.constant dense<0.000000e+00> : vector<16x32xf32>
      %135 = tpu.matmul %133, %134, %cst_49 {dimension_numbers = #tpu.dot_dimension_numbers<[1], [0], [0], [1], [0, 0, 1, 1], [], []>} : vector<16x32xbf16>, vector<32x32xbf16>, vector<16x32xf32> -> vector<16x32xf32>
      %c0_50 = arith.constant 0 : index
      %c0_51 = arith.constant 0 : index
      %136 = vector.load %arg9[%c0_50, %c0_51] : memref<1x32xf32, #tpu.memory_space<vmem>>, vector<1x32xf32>
      %137 = vector.broadcast %136 : vector<1x32xf32> to vector<16x32xf32>
      %138 = arith.addf %135, %137 : vector<16x32xf32>
      %139 = arith.addf %95, %138 : vector<16x32xf32>
      %c0_52 = arith.constant 0 : index
      %c0_53 = arith.constant 0 : index
      %c0_54 = arith.constant 0 : index
      %140 = vector.load %arg14[%c0_52, %c0_53, %c0_54] : memref<6x1x32xf32, #tpu.memory_space<vmem>>, vector<1x1x32xf32>
      %141 = vector.shape_cast %140 : vector<1x1x32xf32> to vector<1x32xf32>
      %c1 = arith.constant 1 : index
      %c0_55 = arith.constant 0 : index
      %c0_56 = arith.constant 0 : index
      %142 = vector.load %arg14[%c1, %c0_55, %c0_56] : memref<6x1x32xf32, #tpu.memory_space<vmem>>, vector<1x1x32xf32>
      %143 = vector.shape_cast %142 : vector<1x1x32xf32> to vector<1x32xf32>
      %cst_57 = arith.constant dense<0.000000e+00> : vector<16xf32>
      %144 = vector.multi_reduction <add>, %139, %cst_57 [1] : vector<16x32xf32> to vector<16xf32>
      %145 = vector.shape_cast %144 : vector<16xf32> to vector<16x1xf32>
      %cst_58 = arith.constant 3.200000e+01 : f32
      %146 = vector.broadcast %cst_58 : f32 to vector<16x1xf32>
      %147 = arith.divf %145, %146 : vector<16x1xf32>
      %148 = vector.broadcast %147 : vector<16x1xf32> to vector<16x32xf32>
      %149 = arith.subf %139, %148 : vector<16x32xf32>
      %150 = arith.mulf %149, %149 : vector<16x32xf32>
      %cst_59 = arith.constant dense<0.000000e+00> : vector<16xf32>
      %151 = vector.multi_reduction <add>, %150, %cst_59 [1] : vector<16x32xf32> to vector<16xf32>
      %152 = vector.shape_cast %151 : vector<16xf32> to vector<16x1xf32>
      %cst_60 = arith.constant 3.200000e+01 : f32
      %153 = vector.broadcast %cst_60 : f32 to vector<16x1xf32>
      %154 = arith.divf %152, %153 : vector<16x1xf32>
      %155 = vector.broadcast %147 : vector<16x1xf32> to vector<16x32xf32>
      %156 = arith.subf %139, %155 : vector<16x32xf32>
      %cst_61 = arith.constant 9.99999974E-6 : f32
      %157 = vector.broadcast %cst_61 : f32 to vector<16x1xf32>
      %158 = arith.addf %154, %157 : vector<16x1xf32>
      %159 = math.sqrt %158 : vector<16x1xf32>
      %160 = vector.broadcast %159 : vector<16x1xf32> to vector<16x32xf32>
      %161 = arith.divf %156, %160 : vector<16x32xf32>
      %162 = vector.broadcast %141 : vector<1x32xf32> to vector<16x32xf32>
      %163 = arith.mulf %161, %162 : vector<16x32xf32>
      %164 = vector.broadcast %143 : vector<1x32xf32> to vector<16x32xf32>
      %165 = arith.addf %163, %164 : vector<16x32xf32>
      %166 = arith.truncf %165 : vector<16x32xf32> to vector<16x32xbf16>
      %c0_62 = arith.constant 0 : index
      %c0_63 = arith.constant 0 : index
      %167 = vector.load %arg10[%c0_62, %c0_63] : memref<32x128xbf16, #tpu.memory_space<vmem>>, vector<32x128xbf16>
      %cst_64 = arith.constant dense<0.000000e+00> : vector<16x128xf32>
      %168 = tpu.matmul %166, %167, %cst_64 {dimension_numbers = #tpu.dot_dimension_numbers<[1], [0], [0], [1], [0, 0, 1, 1], [], []>} : vector<16x32xbf16>, vector<32x128xbf16>, vector<16x128xf32> -> vector<16x128xf32>
      %c0_65 = arith.constant 0 : index
      %c0_66 = arith.constant 0 : index
      %169 = vector.load %arg11[%c0_65, %c0_66] : memref<1x128xf32, #tpu.memory_space<vmem>>, vector<1x128xf32>
      %170 = vector.broadcast %169 : vector<1x128xf32> to vector<16x128xf32>
      %171 = arith.addf %168, %170 : vector<16x128xf32>
      %cst_67 = arith.constant 5.000000e-01 : f32
      %172 = vector.broadcast %cst_67 : f32 to vector<16x128xf32>
      %173 = arith.mulf %172, %171 : vector<16x128xf32>
      %cst_68 = arith.constant 4.471500e-02 : f32
      %174 = vector.broadcast %cst_68 : f32 to vector<16x128xf32>
      %175 = arith.mulf %174, %171 : vector<16x128xf32>
      %176 = arith.mulf %175, %171 : vector<16x128xf32>
      %177 = arith.mulf %176, %171 : vector<16x128xf32>
      %178 = arith.addf %171, %177 : vector<16x128xf32>
      %cst_69 = arith.constant 0.797884583 : f32
      %179 = vector.broadcast %cst_69 : f32 to vector<16x128xf32>
      %180 = arith.mulf %179, %178 : vector<16x128xf32>
      %181 = math.tanh %180 : vector<16x128xf32>
      %cst_70 = arith.constant 1.000000e+00 : f32
      %182 = vector.broadcast %cst_70 : f32 to vector<16x128xf32>
      %183 = arith.addf %182, %181 : vector<16x128xf32>
      %184 = arith.mulf %173, %183 : vector<16x128xf32>
      %185 = arith.truncf %184 : vector<16x128xf32> to vector<16x128xbf16>
      %c0_71 = arith.constant 0 : index
      %c0_72 = arith.constant 0 : index
      %186 = vector.load %arg12[%c0_71, %c0_72] : memref<128x32xbf16, #tpu.memory_space<vmem>>, vector<128x32xbf16>
      %cst_73 = arith.constant dense<0.000000e+00> : vector<16x32xf32>
      %187 = tpu.matmul %185, %186, %cst_73 {dimension_numbers = #tpu.dot_dimension_numbers<[1], [0], [0], [1], [0, 0, 1, 1], [], []>} : vector<16x128xbf16>, vector<128x32xbf16>, vector<16x32xf32> -> vector<16x32xf32>
      %c0_74 = arith.constant 0 : index
      %c0_75 = arith.constant 0 : index
      %188 = vector.load %arg13[%c0_74, %c0_75] : memref<1x32xf32, #tpu.memory_space<vmem>>, vector<1x32xf32>
      %189 = vector.broadcast %188 : vector<1x32xf32> to vector<16x32xf32>
      %190 = arith.addf %187, %189 : vector<16x32xf32>
      %191 = arith.addf %165, %190 : vector<16x32xf32>
      %c2 = arith.constant 2 : index
      %c0_76 = arith.constant 0 : index
      %c0_77 = arith.constant 0 : index
      %192 = vector.load %arg14[%c2, %c0_76, %c0_77] : memref<6x1x32xf32, #tpu.memory_space<vmem>>, vector<1x1x32xf32>
      %193 = vector.shape_cast %192 : vector<1x1x32xf32> to vector<1x32xf32>
      %c3 = arith.constant 3 : index
      %c0_78 = arith.constant 0 : index
      %c0_79 = arith.constant 0 : index
      %194 = vector.load %arg14[%c3, %c0_78, %c0_79] : memref<6x1x32xf32, #tpu.memory_space<vmem>>, vector<1x1x32xf32>
      %195 = vector.shape_cast %194 : vector<1x1x32xf32> to vector<1x32xf32>
      %cst_80 = arith.constant dense<0.000000e+00> : vector<16xf32>
      %196 = vector.multi_reduction <add>, %191, %cst_80 [1] : vector<16x32xf32> to vector<16xf32>
      %197 = vector.shape_cast %196 : vector<16xf32> to vector<16x1xf32>
      %cst_81 = arith.constant 3.200000e+01 : f32
      %198 = vector.broadcast %cst_81 : f32 to vector<16x1xf32>
      %199 = arith.divf %197, %198 : vector<16x1xf32>
      %200 = vector.broadcast %199 : vector<16x1xf32> to vector<16x32xf32>
      %201 = arith.subf %191, %200 : vector<16x32xf32>
      %202 = arith.mulf %201, %201 : vector<16x32xf32>
      %cst_82 = arith.constant dense<0.000000e+00> : vector<16xf32>
      %203 = vector.multi_reduction <add>, %202, %cst_82 [1] : vector<16x32xf32> to vector<16xf32>
      %204 = vector.shape_cast %203 : vector<16xf32> to vector<16x1xf32>
      %cst_83 = arith.constant 3.200000e+01 : f32
      %205 = vector.broadcast %cst_83 : f32 to vector<16x1xf32>
      %206 = arith.divf %204, %205 : vector<16x1xf32>
      %207 = vector.broadcast %199 : vector<16x1xf32> to vector<16x32xf32>
      %208 = arith.subf %191, %207 : vector<16x32xf32>
      %cst_84 = arith.constant 9.99999974E-6 : f32
      %209 = vector.broadcast %cst_84 : f32 to vector<16x1xf32>
      %210 = arith.addf %206, %209 : vector<16x1xf32>
      %211 = math.sqrt %210 : vector<16x1xf32>
      %212 = vector.broadcast %211 : vector<16x1xf32> to vector<16x32xf32>
      %213 = arith.divf %208, %212 : vector<16x32xf32>
      %214 = vector.broadcast %193 : vector<1x32xf32> to vector<16x32xf32>
      %215 = arith.mulf %213, %214 : vector<16x32xf32>
      %216 = vector.broadcast %195 : vector<1x32xf32> to vector<16x32xf32>
      %217 = arith.addf %215, %216 : vector<16x32xf32>
      %218 = arith.truncf %217 : vector<16x32xf32> to vector<16x32xbf16>
      %c0_85 = arith.constant 0 : index
      %c0_86 = arith.constant 0 : index
      %219 = vector.load %arg15[%c0_85, %c0_86] : memref<32x32xbf16, #tpu.memory_space<vmem>>, vector<32x32xbf16>
      %cst_87 = arith.constant dense<0.000000e+00> : vector<16x32xf32>
      %220 = tpu.matmul %218, %219, %cst_87 {dimension_numbers = #tpu.dot_dimension_numbers<[1], [0], [0], [1], [0, 0, 1, 1], [], []>} : vector<16x32xbf16>, vector<32x32xbf16>, vector<16x32xf32> -> vector<16x32xf32>
      %c0_88 = arith.constant 0 : index
      %c0_89 = arith.constant 0 : index
      %221 = vector.load %arg16[%c0_88, %c0_89] : memref<1x32xf32, #tpu.memory_space<vmem>>, vector<1x32xf32>
      %222 = vector.broadcast %221 : vector<1x32xf32> to vector<16x32xf32>
      %223 = arith.addf %220, %222 : vector<16x32xf32>
      %cst_90 = arith.constant 5.000000e-01 : f32
      %224 = vector.broadcast %cst_90 : f32 to vector<16x32xf32>
      %225 = arith.mulf %224, %223 : vector<16x32xf32>
      %cst_91 = arith.constant 4.471500e-02 : f32
      %226 = vector.broadcast %cst_91 : f32 to vector<16x32xf32>
      %227 = arith.mulf %226, %223 : vector<16x32xf32>
      %228 = arith.mulf %227, %223 : vector<16x32xf32>
      %229 = arith.mulf %228, %223 : vector<16x32xf32>
      %230 = arith.addf %223, %229 : vector<16x32xf32>
      %cst_92 = arith.constant 0.797884583 : f32
      %231 = vector.broadcast %cst_92 : f32 to vector<16x32xf32>
      %232 = arith.mulf %231, %230 : vector<16x32xf32>
      %233 = math.tanh %232 : vector<16x32xf32>
      %cst_93 = arith.constant 1.000000e+00 : f32
      %234 = vector.broadcast %cst_93 : f32 to vector<16x32xf32>
      %235 = arith.addf %234, %233 : vector<16x32xf32>
      %236 = arith.mulf %225, %235 : vector<16x32xf32>
      %c4 = arith.constant 4 : index
      %c0_94 = arith.constant 0 : index
      %c0_95 = arith.constant 0 : index
      %237 = vector.load %arg14[%c4, %c0_94, %c0_95] : memref<6x1x32xf32, #tpu.memory_space<vmem>>, vector<1x1x32xf32>
      %238 = vector.shape_cast %237 : vector<1x1x32xf32> to vector<1x32xf32>
      %c5 = arith.constant 5 : index
      %c0_96 = arith.constant 0 : index
      %c0_97 = arith.constant 0 : index
      %239 = vector.load %arg14[%c5, %c0_96, %c0_97] : memref<6x1x32xf32, #tpu.memory_space<vmem>>, vector<1x1x32xf32>
      %240 = vector.shape_cast %239 : vector<1x1x32xf32> to vector<1x32xf32>
      %cst_98 = arith.constant dense<0.000000e+00> : vector<16xf32>
      %241 = vector.multi_reduction <add>, %236, %cst_98 [1] : vector<16x32xf32> to vector<16xf32>
      %242 = vector.shape_cast %241 : vector<16xf32> to vector<16x1xf32>
      %cst_99 = arith.constant 3.200000e+01 : f32
      %243 = vector.broadcast %cst_99 : f32 to vector<16x1xf32>
      %244 = arith.divf %242, %243 : vector<16x1xf32>
      %245 = vector.broadcast %244 : vector<16x1xf32> to vector<16x32xf32>
      %246 = arith.subf %236, %245 : vector<16x32xf32>
      %247 = arith.mulf %246, %246 : vector<16x32xf32>
      %cst_100 = arith.constant dense<0.000000e+00> : vector<16xf32>
      %248 = vector.multi_reduction <add>, %247, %cst_100 [1] : vector<16x32xf32> to vector<16xf32>
      %249 = vector.shape_cast %248 : vector<16xf32> to vector<16x1xf32>
      %cst_101 = arith.constant 3.200000e+01 : f32
      %250 = vector.broadcast %cst_101 : f32 to vector<16x1xf32>
      %251 = arith.divf %249, %250 : vector<16x1xf32>
      %252 = vector.broadcast %244 : vector<16x1xf32> to vector<16x32xf32>
      %253 = arith.subf %236, %252 : vector<16x32xf32>
      %cst_102 = arith.constant 9.99999974E-6 : f32
      %254 = vector.broadcast %cst_102 : f32 to vector<16x1xf32>
      %255 = arith.addf %251, %254 : vector<16x1xf32>
      %256 = math.sqrt %255 : vector<16x1xf32>
      %257 = vector.broadcast %256 : vector<16x1xf32> to vector<16x32xf32>
      %258 = arith.divf %253, %257 : vector<16x32xf32>
      %259 = vector.broadcast %238 : vector<1x32xf32> to vector<16x32xf32>
      %260 = arith.mulf %258, %259 : vector<16x32xf32>
      %261 = vector.broadcast %240 : vector<1x32xf32> to vector<16x32xf32>
      %262 = arith.addf %260, %261 : vector<16x32xf32>
      %263 = vector.shape_cast %262 : vector<16x32xf32> to vector<2x8x32xf32>
      %cst_103 = arith.constant dense<0.000000e+00> : vector<2x32xf32>
      %264 = vector.multi_reduction <add>, %263, %cst_103 [1] : vector<2x8x32xf32> to vector<2x32xf32>
      %cst_104 = arith.constant 8.000000e+00 : f32
      %265 = vector.broadcast %cst_104 : f32 to vector<2x32xf32>
      %266 = arith.divf %264, %265 : vector<2x32xf32>
      %267 = arith.truncf %266 : vector<2x32xf32> to vector<2x32xbf16>
      %c0_105 = arith.constant 0 : index
      %c0_106 = arith.constant 0 : index
      %268 = vector.load %arg22[%c0_105, %c0_106] : memref<2x32xbf16, #tpu.memory_space<vmem>>, vector<2x32xbf16>
      tpu.vector_store %arg22[%c0_105, %c0_106], %267 {strides = array<i32>} : memref<2x32xbf16, #tpu.memory_space<vmem>>, vector<2x32xbf16>,
      %cst_107 = arith.constant 0.000000e+00 : f32
      %269 = vector.broadcast %cst_107 : f32 to vector<2x512xf32>
      %c0_108 = arith.constant 0 : index
      %c0_109 = arith.constant 0 : index
      %270 = vector.load %arg23[%c0_108, %c0_109] : memref<2x512xf32, #tpu.memory_space<vmem>>, vector<2x512xf32>
      tpu.vector_store %arg23[%c0_108, %c0_109], %269 {strides = array<i32>} : memref<2x512xf32, #tpu.memory_space<vmem>>, vector<2x512xf32>,
    } else {
    }
    %c0 = arith.constant 0 : index
    %c0_1 = arith.constant 0 : index
    %3 = vector.load %arg22[%c0, %c0_1] : memref<2x32xbf16, #tpu.memory_space<vmem>>, vector<2x32xbf16>
    %c0_2 = arith.constant 0 : index
    %c0_3 = arith.constant 0 : index
    %4 = vector.load %arg18[%c0_2, %c0_3] : memref<32x512xbf16, #tpu.memory_space<vmem>>, vector<32x512xbf16>
    %cst = arith.constant dense<0.000000e+00> : vector<2x512xf32>
    %5 = tpu.matmul %3, %4, %cst {dimension_numbers = #tpu.dot_dimension_numbers<[1], [0], [0], [1], [0, 0, 1, 1], [], []>} : vector<2x32xbf16>, vector<32x512xbf16>, vector<2x512xf32> -> vector<2x512xf32>
    %c0_4 = arith.constant 0 : index
    %c0_5 = arith.constant 0 : index
    %6 = vector.load %arg19[%c0_4, %c0_5] : memref<1x512xf32, #tpu.memory_space<vmem>>, vector<1x512xf32>
    %7 = vector.broadcast %6 : vector<1x512xf32> to vector<2x512xf32>
    %8 = arith.addf %5, %7 : vector<2x512xf32>
    %9 = arith.negf %8 : vector<2x512xf32>
    %10 = math.exp %9 : vector<2x512xf32>
    %cst_6 = arith.constant 1.000000e+00 : f32
    %11 = vector.broadcast %cst_6 : f32 to vector<2x512xf32>
    %12 = arith.addf %11, %10 : vector<2x512xf32>
    %13 = arith.divf %11, %12 : vector<2x512xf32>
    %c0_7 = arith.constant 0 : index
    %c0_8 = arith.constant 0 : index
    %14 = vector.load %arg20[%c0_7, %c0_8] : memref<2x512xf32, #tpu.memory_space<vmem>>, vector<2x512xf32>
    tpu.vector_store %arg20[%c0_7, %c0_8], %13 {strides = array<i32>} : memref<2x512xf32, #tpu.memory_space<vmem>>, vector<2x512xf32>,
    %c0_9 = arith.constant 0 : index
    %c0_10 = arith.constant 0 : index
    %15 = vector.load %arg17[%c0_9, %c0_10] : memref<2x8xi32, #tpu.memory_space<vmem>>, vector<2x8xi32>
    %c512_i32 = arith.constant 512 : i32
    %16 = arith.muli %arg0, %c512_i32 : i32
    %17 = tpu.iota {dimensions = array<i32: 1>} : vector<2x512xi32>
    %18 = vector.broadcast %16 : i32 to vector<2x512xi32>
    %19 = arith.addi %18, %17 : vector<2x512xi32>
    %cst_11 = arith.constant 0.000000e+00 : f32
    %20 = vector.broadcast %cst_11 : f32 to vector<2x512xf32>
    %21 = vector.extract_strided_slice %15 {offsets = [0, 0], sizes = [2, 1], strides = [1, 1]} : vector<2x8xi32> to vector<2x1xi32>
    %22 = vector.broadcast %21 : vector<2x1xi32> to vector<2x512xi32>
    %23 = arith.cmpi eq, %19, %22 : vector<2x512xi32>
    %24 = arith.extui %23 : vector<2x512xi1> to vector<2x512xi32>
    %25 = arith.sitofp %24 : vector<2x512xi32> to vector<2x512xf32>
    %26 = arith.maximumf %20, %25 : vector<2x512xf32>
    %27 = vector.extract_strided_slice %15 {offsets = [0, 1], sizes = [2, 1], strides = [1, 1]} : vector<2x8xi32> to vector<2x1xi32>
    %28 = vector.broadcast %27 : vector<2x1xi32> to vector<2x512xi32>
    %29 = arith.cmpi eq, %19, %28 : vector<2x512xi32>
    %30 = arith.extui %29 : vector<2x512xi1> to vector<2x512xi32>
    %31 = arith.sitofp %30 : vector<2x512xi32> to vector<2x512xf32>
    %32 = arith.maximumf %26, %31 : vector<2x512xf32>
    %33 = vector.extract_strided_slice %15 {offsets = [0, 2], sizes = [2, 1], strides = [1, 1]} : vector<2x8xi32> to vector<2x1xi32>
    %34 = vector.broadcast %33 : vector<2x1xi32> to vector<2x512xi32>
    %35 = arith.cmpi eq, %19, %34 : vector<2x512xi32>
    %36 = arith.extui %35 : vector<2x512xi1> to vector<2x512xi32>
    %37 = arith.sitofp %36 : vector<2x512xi32> to vector<2x512xf32>
    %38 = arith.maximumf %32, %37 : vector<2x512xf32>
    %39 = vector.extract_strided_slice %15 {offsets = [0, 3], sizes = [2, 1], strides = [1, 1]} : vector<2x8xi32> to vector<2x1xi32>
    %40 = vector.broadcast %39 : vector<2x1xi32> to vector<2x512xi32>
    %41 = arith.cmpi eq, %19, %40 : vector<2x512xi32>
    %42 = arith.extui %41 : vector<2x512xi1> to vector<2x512xi32>
    %43 = arith.sitofp %42 : vector<2x512xi32> to vector<2x512xf32>
    %44 = arith.maximumf %38, %43 : vector<2x512xf32>
    %45 = vector.extract_strided_slice %15 {offsets = [0, 4], sizes = [2, 1], strides = [1, 1]} : vector<2x8xi32> to vector<2x1xi32>
    %46 = vector.broadcast %45 : vector<2x1xi32> to vector<2x512xi32>
    %47 = arith.cmpi eq, %19, %46 : vector<2x512xi32>
    %48 = arith.extui %47 : vector<2x512xi1> to vector<2x512xi32>
    %49 = arith.sitofp %48 : vector<2x512xi32> to vector<2x512xf32>
    %50 = arith.maximumf %44, %49 : vector<2x512xf32>
    %51 = vector.extract_strided_slice %15 {offsets = [0, 5], sizes = [2, 1], strides = [1, 1]} : vector<2x8xi32> to vector<2x1xi32>
    %52 = vector.broadcast %51 : vector<2x1xi32> to vector<2x512xi32>
    %53 = arith.cmpi eq, %19, %52 : vector<2x512xi32>
    %54 = arith.extui %53 : vector<2x512xi1> to vector<2x512xi32>
    %55 = arith.sitofp %54 : vector<2x512xi32> to vector<2x512xf32>
    %56 = arith.maximumf %50, %55 : vector<2x512xf32>
    %57 = vector.extract_strided_slice %15 {offsets = [0, 6], sizes = [2, 1], strides = [1, 1]} : vector<2x8xi32> to vector<2x1xi32>
    %58 = vector.broadcast %57 : vector<2x1xi32> to vector<2x512xi32>
    %59 = arith.cmpi eq, %19, %58 : vector<2x512xi32>
    %60 = arith.extui %59 : vector<2x512xi1> to vector<2x512xi32>
    %61 = arith.sitofp %60 : vector<2x512xi32> to vector<2x512xf32>
    %62 = arith.maximumf %56, %61 : vector<2x512xf32>
    %63 = vector.extract_strided_slice %15 {offsets = [0, 7], sizes = [2, 1], strides = [1, 1]} : vector<2x8xi32> to vector<2x1xi32>
    %64 = vector.broadcast %63 : vector<2x1xi32> to vector<2x512xi32>
    %65 = arith.cmpi eq, %19, %64 : vector<2x512xi32>
    %66 = arith.extui %65 : vector<2x512xi1> to vector<2x512xi32>
    %67 = arith.sitofp %66 : vector<2x512xi32> to vector<2x512xf32>
    %68 = arith.maximumf %62, %67 : vector<2x512xf32>
    %c3_i32 = arith.constant 3 : i32
    %69 = vector.broadcast %c3_i32 : i32 to vector<2x512xi32>
    %70 = arith.cmpi slt, %19, %69 : vector<2x512xi32>
    %cst_12 = arith.constant 0.000000e+00 : f32
    %71 = vector.broadcast %cst_12 : f32 to vector<2x512xf32>
    %72 = arith.select %70, %71, %68 : vector<2x512xi1>, vector<2x512xf32>
    %73 = math.log %13 : vector<2x512xf32>
    %cst_13 = arith.constant -1.000000e+02 : f32
    %74 = vector.broadcast %cst_13 : f32 to vector<2x512xf32>
    %75 = arith.maximumf %73, %74 : vector<2x512xf32>
    %cst_14 = arith.constant 1.000000e+00 : f32
    %76 = vector.broadcast %cst_14 : f32 to vector<2x512xf32>
    %77 = arith.subf %76, %13 : vector<2x512xf32>
    %78 = math.log %77 : vector<2x512xf32>
    %cst_15 = arith.constant -1.000000e+02 : f32
    %79 = vector.broadcast %cst_15 : f32 to vector<2x512xf32>
    %80 = arith.maximumf %78, %79 : vector<2x512xf32>
    %c0_16 = arith.constant 0 : index
    %c0_17 = arith.constant 0 : index
    %81 = vector.load %arg23[%c0_16, %c0_17] : memref<2x512xf32, #tpu.memory_space<vmem>>, vector<2x512xf32>
    %82 = arith.mulf %72, %75 : vector<2x512xf32>
    %cst_18 = arith.constant 1.000000e+00 : f32
    %83 = vector.broadcast %cst_18 : f32 to vector<2x512xf32>
    %84 = arith.subf %83, %72 : vector<2x512xf32>
    %85 = arith.mulf %84, %80 : vector<2x512xf32>
    %86 = arith.addf %82, %85 : vector<2x512xf32>
    %cst_19 = arith.constant 0.000000e+00 : f32
    %87 = vector.broadcast %cst_19 : f32 to vector<2x512xf32>
    %88 = arith.subf %87, %86 : vector<2x512xf32>
    %89 = arith.addf %81, %88 : vector<2x512xf32>
    %c0_20 = arith.constant 0 : index
    %c0_21 = arith.constant 0 : index
    %90 = vector.load %arg23[%c0_20, %c0_21] : memref<2x512xf32, #tpu.memory_space<vmem>>, vector<2x512xf32>
    tpu.vector_store %arg23[%c0_20, %c0_21], %89 {strides = array<i32>} : memref<2x512xf32, #tpu.memory_space<vmem>>, vector<2x512xf32>,
    %c0_i32_22 = arith.constant 0 : i32
    %91 = arith.cmpi eq, %arg0, %c0_i32_22 : i32
    %92 = arith.extui %91 : i1 to i32
    %c0_i32_23 = arith.constant 0 : i32
    %93 = arith.cmpi ne, %92, %c0_i32_23 : i32
    scf.if %93 {
      %c0_24 = arith.constant 0 : index
      %c0_25 = arith.constant 0 : index
      %94 = vector.load %arg23[%c0_24, %c0_25] : memref<2x512xf32, #tpu.memory_space<vmem>>, vector<2x512xf32>
      %95 = vector.shape_cast %94 : vector<2x512xf32> to vector<1x2x512xf32>
      %cst_26 = arith.constant dense<0.000000e+00> : vector<1xf32>
      %96 = vector.multi_reduction <add>, %95, %cst_26 [1, 2] : vector<1x2x512xf32> to vector<1xf32>
      %97 = vector.shape_cast %96 : vector<1xf32> to vector<1x1x1xf32>
      %98 = vector.extract %97[0, 0, 0] : f32 from vector<1x1x1xf32>
      %99 = vector.broadcast %98 : f32 to vector<1x1xf32>
      %cst_27 = arith.constant 1.024000e+03 : f32
      %100 = vector.broadcast %cst_27 : f32 to vector<1x1xf32>
      %101 = arith.divf %99, %100 : vector<1x1xf32>
      %c0_28 = arith.constant 0 : index
      %c0_29 = arith.constant 0 : index
      %102 = vector.load %arg21[%c0_28, %c0_29] : memref<1x1xf32, #tpu.memory_space<vmem>>, vector<1x1xf32>
      tpu.vector_store %arg21[%c0_28, %c0_29], %101 {strides = array<i32>} : memref<1x1xf32, #tpu.memory_space<vmem>>, vector<1x1xf32>,
    } else {
    }
    return
  }
  func.func @transform_0(%arg0: i32) -> (i32, i32, i32) {
    %c0_i32 = arith.constant 0 : i32
    %c0_i32_0 = arith.constant 0 : i32
    %c0_i32_1 = arith.constant 0 : i32
    %c0_i32_2 = arith.constant 0 : i32
    return %c0_i32, %c0_i32_0, %c0_i32_1 : i32, i32, i32
  }
  func.func @transform_1(%arg0: i32) -> (i32, i32) {
    %c0_i32 = arith.constant 0 : i32
    %c0_i32_0 = arith.constant 0 : i32
    %c0_i32_1 = arith.constant 0 : i32
    return %c0_i32, %c0_i32_0 : i32, i32
  }
  func.func @transform_2(%arg0: i32) -> (i32, i32) {
    %c0_i32 = arith.constant 0 : i32
    %c0_i32_0 = arith.constant 0 : i32
    %c0_i32_1 = arith.constant 0 : i32
    return %c0_i32, %c0_i32_0 : i32, i32
  }
  func.func @transform_3(%arg0: i32) -> (i32, i32) {
    %c0_i32 = arith.constant 0 : i32
    %c0_i32_0 = arith.constant 0 : i32
    %c0_i32_1 = arith.constant 0 : i32
    return %c0_i32, %c0_i32_0 : i32, i32
  }
  func.func @transform_4(%arg0: i32) -> (i32, i32) {
    %c0_i32 = arith.constant 0 : i32
    %c0_i32_0 = arith.constant 0 : i32
    %c0_i32_1 = arith.constant 0 : i32
    return %c0_i32, %c0_i32_0 : i32, i32
  }
  func.func @transform_5(%arg0: i32) -> (i32, i32) {
    %c0_i32 = arith.constant 0 : i32
    %c0_i32_0 = arith.constant 0 : i32
    %c0_i32_1 = arith.constant 0 : i32
    return %c0_i32, %c0_i32_0 : i32, i32
  }
  func.func @transform_6(%arg0: i32) -> (i32, i32) {
    %c0_i32 = arith.constant 0 : i32
    %c0_i32_0 = arith.constant 0 : i32
    %c0_i32_1 = arith.constant 0 : i32
    return %c0_i32, %c0_i32_0 : i32, i32
  }
  func.func @transform_7(%arg0: i32) -> (i32, i32) {
    %c0_i32 = arith.constant 0 : i32
    %c0_i32_0 = arith.constant 0 : i32
    %c0_i32_1 = arith.constant 0 : i32
    return %c0_i32, %c0_i32_0 : i32, i32
  }
  func.func @transform_8(%arg0: i32) -> (i32, i32) {
    %c0_i32 = arith.constant 0 : i32
    %c0_i32_0 = arith.constant 0 : i32
    %c0_i32_1 = arith.constant 0 : i32
    return %c0_i32, %c0_i32_0 : i32, i32
  }
  func.func @transform_9(%arg0: i32) -> (i32, i32) {
    %c0_i32 = arith.constant 0 : i32
    %c0_i32_0 = arith.constant 0 : i32
    %c0_i32_1 = arith.constant 0 : i32
    return %c0_i32, %c0_i32_0 : i32, i32
  }
  func.func @transform_10(%arg0: i32) -> (i32, i32) {
    %c0_i32 = arith.constant 0 : i32
    %c0_i32_0 = arith.constant 0 : i32
    %c0_i32_1 = arith.constant 0 : i32
    return %c0_i32, %c0_i32_0 : i32, i32
  }
  func.func @transform_11(%arg0: i32) -> (i32, i32) {
    %c0_i32 = arith.constant 0 : i32
    %c0_i32_0 = arith.constant 0 : i32
    %c0_i32_1 = arith.constant 0 : i32
    return %c0_i32, %c0_i32_0 : i32, i32
  }
  func.func @transform_12(%arg0: i32) -> (i32, i32) {
    %c0_i32 = arith.constant 0 : i32
    %c0_i32_0 = arith.constant 0 : i32
    %c0_i32_1 = arith.constant 0 : i32
    return %c0_i32, %c0_i32_0 : i32, i32
  }
  func.func @transform_13(%arg0: i32) -> (i32, i32, i32) {
    %c0_i32 = arith.constant 0 : i32
    %c0_i32_0 = arith.constant 0 : i32
    %c0_i32_1 = arith.constant 0 : i32
    %c0_i32_2 = arith.constant 0 : i32
    return %c0_i32, %c0_i32_0, %c0_i32_1 : i32, i32, i32
  }
  func.func @transform_14(%arg0: i32) -> (i32, i32) {
    %c0_i32 = arith.constant 0 : i32
    %c0_i32_0 = arith.constant 0 : i32
    %c0_i32_1 = arith.constant 0 : i32
    return %c0_i32, %c0_i32_0 : i32, i32
  }
  func.func @transform_15(%arg0: i32) -> (i32, i32) {
    %c0_i32 = arith.constant 0 : i32
    %c0_i32_0 = arith.constant 0 : i32
    %c0_i32_1 = arith.constant 0 : i32
    return %c0_i32, %c0_i32_0 : i32, i32
  }
  func.func @transform_16(%arg0: i32) -> (i32, i32) {
    %c0_i32 = arith.constant 0 : i32
    %c0_i32_0 = arith.constant 0 : i32
    %c0_i32_1 = arith.constant 0 : i32
    return %c0_i32, %c0_i32_0 : i32, i32
  }
  func.func @transform_17(%arg0: i32) -> (i32, i32) {
    %c0_i32 = arith.constant 0 : i32
    %c0_i32_0 = arith.constant 0 : i32
    return %c0_i32, %arg0 : i32, i32
  }
  func.func @transform_18(%arg0: i32) -> (i32, i32) {
    %c0_i32 = arith.constant 0 : i32
    %c0_i32_0 = arith.constant 0 : i32
    return %c0_i32, %arg0 : i32, i32
  }
  func.func @transform_19(%arg0: i32) -> (i32, i32) {
    %c0_i32 = arith.constant 0 : i32
    %c0_i32_0 = arith.constant 0 : i32
    return %c0_i32, %arg0 : i32, i32
  }
  func.func @transform_20(%arg0: i32) -> (i32, i32) {
    %c0_i32 = arith.constant 0 : i32
    %c0_i32_0 = arith.constant 0 : i32
    %c0_i32_1 = arith.constant 0 : i32
    return %c0_i32, %c0_i32_0 : i32, i32
  }
}

</mosaic_0001>

<llo_original>
// kernel: inversion_plm_mlc_forward.1
$region0: #{inversion_plm_mlc_forward.1}
  #allocation0 [shape = 'u32[]', space=smem, size = 0x4, offset = 0x4, fixed_abs, tag = 'smem constant byte address 0x4 - core index']
  #allocation1 [shape = 'u32[144,128]{1,0:T(1,128)}', space=vmem, size = 0x12000, scoped, tag = 'internal scratch']
  #allocation2 [shape = 'bf16[2,32]{1,0:T(2,128)(2,1)}', space=vmem, size = 0x200, scoped, tag = 'scratch operand']
  #allocation3 [shape = 'f32[2,512]{1,0:T(2,128)}', space=vmem, size = 0x1000, scoped, tag = 'scratch operand']
  %s0 = inlined_call_operand.vmem [shape: f32[2,8,32], index: 0, kind: input, shape index: {}]
  %s1 = inlined_call_operand.vmem [shape: bf16[32,32], index: 1, kind: input, shape index: {}]
  %s2 = inlined_call_operand.hbm [shape: f32[1,32], index: 2, kind: input, shape index: {}]
  %s3 = inlined_call_operand.hbm [shape: bf16[32,32], index: 3, kind: input, shape index: {}]
  %s4 = inlined_call_operand.hbm [shape: f32[1,32], index: 4, kind: input, shape index: {}]
  %s5 = inlined_call_operand.vmem [shape: bf16[32,32], index: 5, kind: input, shape index: {}]
  %s6 = inlined_call_operand.hbm [shape: f32[1,32], index: 6, kind: input, shape index: {}]
  %s7 = inlined_call_operand.hbm [shape: bf16[32,32], index: 7, kind: input, shape index: {}]
  %s8 = inlined_call_operand.hbm [shape: f32[1,32], index: 8, kind: input, shape index: {}]
  %s9 = inlined_call_operand.hbm [shape: bf16[32,128], index: 9, kind: input, shape index: {}]
  %s10 = inlined_call_operand.hbm [shape: f32[1,128], index: 10, kind: input, shape index: {}]
  %s11 = inlined_call_operand.vmem [shape: bf16[128,32], index: 11, kind: input, shape index: {}]
  %s12 = inlined_call_operand.hbm [shape: f32[1,32], index: 12, kind: input, shape index: {}]
  %s13 = inlined_call_operand.hbm [shape: f32[6,1,32], index: 13, kind: input, shape index: {}]
  %s14 = inlined_call_operand.hbm [shape: bf16[32,32], index: 14, kind: input, shape index: {}]
  %s15 = inlined_call_operand.hbm [shape: f32[1,32], index: 15, kind: input, shape index: {}]
  %s16 = inlined_call_operand.hbm [shape: s32[2,8], index: 16, kind: input, shape index: {}]
  %s17 = inlined_call_operand.vmem [shape: bf16[32,512], index: 17, kind: input, shape index: {}]
  %s18 = inlined_call_operand.hbm [shape: f32[1,512], index: 18, kind: input, shape index: {}]
  %s19 = inlined_call_operand.hbm [shape: f32[2,512], index: 19, kind: output, shape index: {0}]
  %s20 = inlined_call_operand.hbm [shape: f32[1,1], index: 20, kind: output, shape index: {1}]
  %21 = xla_tuple %s19, %s20
  %s22 = sld [smem:[#allocation0]]
  $region158: #{inversion_plm_mlc_forward.1} parent=0
    _
  %s24 = ssub.s32 1, %s22
  %s25 = scalar_select 0, %s24, %s22
  $region1: #{inversion_plm_mlc_forward.1} parent=0
    #allocation4 [shape = 'u8[512]{0}', space=vmem, size = 0x400, scoped, tag = 'input window, operand 2, single buffered']
    #allocation5 [shape = 's32[1]{0}', space=sflag, size = 0x4, scoped, tag = 'scoped memory for inversion_plm_mlc_forward.1']
    #allocation6 [shape = 's32[1]{0}', space=sflag, size = 0x4, scoped, tag = 'scoped memory for inversion_plm_mlc_forward.1']
    #allocation7 [shape = 'u8[8192]{0}', space=vmem, size = 0x2000, scoped, tag = 'input window, operand 3, single buffered']
    #allocation8 [shape = 's32[1]{0}', space=sflag, size = 0x4, scoped, tag = 'scoped memory for inversion_plm_mlc_forward.1']
    #allocation9 [shape = 'u8[512]{0}', space=vmem, size = 0x400, scoped, tag = 'input window, operand 4, single buffered']
    #allocation10 [shape = 'u8[512]{0}', space=vmem, size = 0x400, scoped, tag = 'input window, operand 6, single buffered']
    #allocation11 [shape = 's32[1]{0}', space=sflag, size = 0x4, scoped, tag = 'scoped memory for inversion_plm_mlc_forward.1']
    #allocation12 [shape = 'u8[8192]{0}', space=vmem, size = 0x2000, scoped, tag = 'input window, operand 7, single buffered']
    #allocation13 [shape = 'u8[512]{0}', space=vmem, size = 0x400, scoped, tag = 'input window, operand 8, single buffered']
    #allocation14 [shape = 's32[1]{0}', space=sflag, size = 0x4, scoped, tag = 'scoped memory for inversion_plm_mlc_forward.1']
    #allocation15 [shape = 'u8[8192]{0}', space=vmem, size = 0x2000, scoped, tag = 'input window, operand 9, single buffered']
    #allocation16 [shape = 'u8[512]{0}', space=vmem, size = 0x400, scoped, tag = 'input window, operand 10, single buffered']
    #allocation17 [shape = 's32[1]{0}', space=sflag, size = 0x4, scoped, tag = 'scoped memory for inversion_plm_mlc_forward.1']
    #allocation18 [shape = 'u8[512]{0}', space=vmem, size = 0x400, scoped, tag = 'input window, operand 12, single buffered']
    #allocation19 [shape = 'u8[3072]{0}', space=vmem, size = 0xc00, scoped, tag = 'input window, operand 13, single buffered']
    #allocation20 [shape = 's32[1]{0}', space=sflag, size = 0x4, scoped, tag = 'scoped memory for inversion_plm_mlc_forward.1']
    #allocation21 [shape = 'u8[8192]{0}', space=vmem, size = 0x2000, scoped, tag = 'input window, operand 14, single buffered']
    #allocation22 [shape = 'u8[512]{0}', space=vmem, size = 0x400, scoped, tag = 'input window, operand 15, single buffered']
    #allocation23 [shape = 's32[1]{0}', space=sflag, size = 0x4, scoped, tag = 'scoped memory for inversion_plm_mlc_forward.1']
    #allocation24 [shape = 'u8[1024]{0}', space=vmem, size = 0x400, scoped, tag = 'input window, operand 16, single buffered']
    #allocation25 [shape = 'u8[2048]{0}', space=vmem, size = 0x800, scoped, tag = 'input window, operand 18, single buffered']
    #allocation26 [shape = 's32[1]{0}', space=sflag, size = 0x4, scoped, tag = 'scoped memory for inversion_plm_mlc_forward.1']
    #allocation27 [shape = 'u8[4096]{0}', space=vmem, size = 0x1000, scoped, tag = 'output window, operand 0, single buffered']
    #allocation28 [shape = 'u8[512]{0}', space=vmem, size = 0x400, scoped, tag = 'output window, operand 1, single buffered']
    #allocation29 [shape = 's32[1]{0}', space=sflag, size = 0x4, scoped, tag = 'scoped memory for inversion_plm_mlc_forward.1']
    %26 = vsyncpa [#allocation5], 0
    %27 = vsyncpa [#allocation8], 0
    %28 = vsyncpa [#allocation11], 0
    %29 = vsyncpa [#allocation14], 0
    %30 = vsyncpa [#allocation17], 0
    %31 = vsyncpa [#allocation20], 0
    %32 = vsyncpa [#allocation23], 0
    %33 = vsyncpa [#allocation26], 0
    %34 = vsyncpa [#allocation6], 0
    %35 = vsyncpa [#allocation29], 0
    // Predicated region
    $region2: #{inversion_plm_mlc_forward.1} parent=1 // pred_check
      _
    $region3: #{inversion_plm_mlc_forward.1} parent=1 // pred_check_branch
      %37 = sbr.rel (0) target = $region5
    $region4: #{inversion_plm_mlc_forward.1} parent=1 // pred_region
      _
    $region5: #{inversion_plm_mlc_forward.1} parent=1 // pred_fallthru
      _
    // Predicated region
    $region6: #{inversion_plm_mlc_forward.1} parent=1 // pred_check
      _
    $region7: #{inversion_plm_mlc_forward.1} parent=1 // pred_check_branch
      %39 = sbr.rel (0) target = $region9
    $region8: #{inversion_plm_mlc_forward.1} parent=1 // pred_region
      _
    $region9: #{inversion_plm_mlc_forward.1} parent=1 // pred_fallthru
      _
    // Predicated region
    $region10: #{inversion_plm_mlc_forward.1} parent=1 // pred_check
      _
    $region11: #{inversion_plm_mlc_forward.1} parent=1 // pred_check_branch
      %41 = sbr.rel (0) target = $region13
    $region12: #{inversion_plm_mlc_forward.1} parent=1 // pred_region
      %s43 = ssub.s32 16, 16
      %44 = vsyncadd [#allocation5], %s43
      %s46 = sshll.u32 [#allocation4], 4
      %s47 = int_to_ptr.vmem [resolvable:$true] %s46
      %49 = dma.hbm_to_vmem [thread:$0]  %s2, 16, %s47, [#allocation5]
    $region13: #{inversion_plm_mlc_forward.1} parent=1 // pred_fallthru
      _
    // Predicated region
    $region14: #{inversion_plm_mlc_forward.1} parent=1 // pred_check
      _
    $region15: #{inversion_plm_mlc_forward.1} parent=1 // pred_check_branch
      %51 = sbr.rel (0) target = $region17
    $region16: #{inversion_plm_mlc_forward.1} parent=1 // pred_region
      %s53 = ssub.s32 256, 256
      %54 = vsyncadd [#allocation8], %s53
      %s55 = sshll.u32 [#allocation7], 4
      %s56 = int_to_ptr.vmem [resolvable:$true] %s55
      %61 = dma.hbm_to_vmem [thread:$0]  %s3, 256, %s56, [#allocation8], 64, 64, 4
    $region17: #{inversion_plm_mlc_forward.1} parent=1 // pred_fallthru
      _
    // Predicated region
    $region18: #{inversion_plm_mlc_forward.1} parent=1 // pred_check
      _
    $region19: #{inversion_plm_mlc_forward.1} parent=1 // pred_check_branch
      %63 = sbr.rel (0) target = $region21
    $region20: #{inversion_plm_mlc_forward.1} parent=1 // pred_region
      %s65 = ssub.s32 16, 16
      %66 = vsyncadd [#allocation8], %s65
      %s68 = sshll.u32 [#allocation9], 4
      %s69 = int_to_ptr.vmem [resolvable:$true] %s68
      %71 = dma.hbm_to_vmem [thread:$0]  %s4, 16, %s69, [#allocation8]
    $region21: #{inversion_plm_mlc_forward.1} parent=1 // pred_fallthru
      _
    // Predicated region
    $region22: #{inversion_plm_mlc_forward.1} parent=1 // pred_check
      _
    $region23: #{inversion_plm_mlc_forward.1} parent=1 // pred_check_branch
      %73 = sbr.rel (0) target = $region25
    $region24: #{inversion_plm_mlc_forward.1} parent=1 // pred_region
      _
    $region25: #{inversion_plm_mlc_forward.1} parent=1 // pred_fallthru
      _
    // Predicated region
    $region26: #{inversion_plm_mlc_forward.1} parent=1 // pred_check
      _
    $region27: #{inversion_plm_mlc_forward.1} parent=1 // pred_check_branch
      %75 = sbr.rel (0) target = $region29
    $region28: #{inversion_plm_mlc_forward.1} parent=1 // pred_region
      %s77 = ssub.s32 16, 16
      %78 = vsyncadd [#allocation11], %s77
      %s80 = sshll.u32 [#allocation10], 4
      %s81 = int_to_ptr.vmem [resolvable:$true] %s80
      %83 = dma.hbm_to_vmem [thread:$0]  %s6, 16, %s81, [#allocation11]
    $region29: #{inversion_plm_mlc_forward.1} parent=1 // pred_fallthru
      _
    // Predicated region
    $region30: #{inversion_plm_mlc_forward.1} parent=1 // pred_check
      _
    $region31: #{inversion_plm_mlc_forward.1} parent=1 // pred_check_branch
      %85 = sbr.rel (0) target = $region33
    $region32: #{inversion_plm_mlc_forward.1} parent=1 // pred_region
      %s87 = ssub.s32 256, 256
      %88 = vsyncadd [#allocation11], %s87
      %s89 = sshll.u32 [#allocation12], 4
      %s90 = int_to_ptr.vmem [resolvable:$true] %s89
      %95 = dma.hbm_to_vmem [thread:$0]  %s7, 256, %s90, [#allocation11], 64, 64, 4
    $region33: #{inversion_plm_mlc_forward.1} parent=1 // pred_fallthru
      _
    // Predicated region
    $region34: #{inversion_plm_mlc_forward.1} parent=1 // pred_check
      _
    $region35: #{inversion_plm_mlc_forward.1} parent=1 // pred_check_branch
      %97 = sbr.rel (0) target = $region37
    $region36: #{inversion_plm_mlc_forward.1} parent=1 // pred_region
      %s99 = ssub.s32 16, 16
      %100 = vsyncadd [#allocation14], %s99
      %s102 = sshll.u32 [#allocation13], 4
      %s103 = int_to_ptr.vmem [resolvable:$true] %s102
      %105 = dma.hbm_to_vmem [thread:$0]  %s8, 16, %s103, [#allocation14]
    $region37: #{inversion_plm_mlc_forward.1} parent=1 // pred_fallthru
      _
    // Predicated region
    $region38: #{inversion_plm_mlc_forward.1} parent=1 // pred_check
      _
    $region39: #{inversion_plm_mlc_forward.1} parent=1 // pred_check_branch
      %107 = sbr.rel (0) target = $region41
    $region40: #{inversion_plm_mlc_forward.1} parent=1 // pred_region
      %s109 = ssub.s32 256, 256
      %110 = vsyncadd [#allocation14], %s109
      %s111 = sshll.u32 [#allocation15], 4
      %s112 = int_to_ptr.vmem [resolvable:$true] %s111
      %117 = dma.hbm_to_vmem [thread:$0]  %s9, 256, %s112, [#allocation14], 64, 64, 4
    $region41: #{inversion_plm_mlc_forward.1} parent=1 // pred_fallthru
      _
    // Predicated region
    $region42: #{inversion_plm_mlc_forward.1} parent=1 // pred_check
      _
    $region43: #{inversion_plm_mlc_forward.1} parent=1 // pred_check_branch
      %119 = sbr.rel (0) target = $region45
    $region44: #{inversion_plm_mlc_forward.1} parent=1 // pred_region
      %s121 = ssub.s32 16, 16
      %122 = vsyncadd [#allocation17], %s121
      %s124 = sshll.u32 [#allocation16], 4
      %s125 = int_to_ptr.vmem [resolvable:$true] %s124
      %127 = dma.hbm_to_vmem [thread:$0]  %s10, 16, %s125, [#allocation17]
    $region45: #{inversion_plm_mlc_forward.1} parent=1 // pred_fallthru
      _
    // Predicated region
    $region46: #{inversion_plm_mlc_forward.1} parent=1 // pred_check
      _
    $region47: #{inversion_plm_mlc_forward.1} parent=1 // pred_check_branch
      %129 = sbr.rel (0) target = $region49
    $region48: #{inversion_plm_mlc_forward.1} parent=1 // pred_region
      _
    $region49: #{inversion_plm_mlc_forward.1} parent=1 // pred_fallthru
      _
    // Predicated region
    $region50: #{inversion_plm_mlc_forward.1} parent=1 // pred_check
      _
    $region51: #{inversion_plm_mlc_forward.1} parent=1 // pred_check_branch
      %131 = sbr.rel (0) target = $region53
    $region52: #{inversion_plm_mlc_forward.1} parent=1 // pred_region
      %s133 = ssub.s32 16, 16
      %134 = vsyncadd [#allocation17], %s133
      %s136 = sshll.u32 [#allocation18], 4
      %s137 = int_to_ptr.vmem [resolvable:$true] %s136
      %139 = dma.hbm_to_vmem [thread:$0]  %s12, 16, %s137, [#allocation17]
    $region53: #{inversion_plm_mlc_forward.1} parent=1 // pred_fallthru
      _
    // Predicated region
    $region54: #{inversion_plm_mlc_forward.1} parent=1 // pred_check
      _
    $region55: #{inversion_plm_mlc_forward.1} parent=1 // pred_check_branch
      %141 = sbr.rel (0) target = $region57
    $region56: #{inversion_plm_mlc_forward.1} parent=1 // pred_region
      %s143 = ssub.s32 96, 96
      %144 = vsyncadd [#allocation20], %s143
      %s145 = sshll.u32 [#allocation19], 4
      %s146 = int_to_ptr.vmem [resolvable:$true] %s145
      %151 = dma.hbm_to_vmem [thread:$0]  %s13, 96, %s146, [#allocation20], 16, 16, 1
    $region57: #{inversion_plm_mlc_forward.1} parent=1 // pred_fallthru
      _
    // Predicated region
    $region58: #{inversion_plm_mlc_forward.1} parent=1 // pred_check
      _
    $region59: #{inversion_plm_mlc_forward.1} parent=1 // pred_check_branch
      %153 = sbr.rel (0) target = $region61
    $region60: #{inversion_plm_mlc_forward.1} parent=1 // pred_region
      %s155 = ssub.s32 256, 256
      %156 = vsyncadd [#allocation20], %s155
      %s157 = sshll.u32 [#allocation21], 4
      %s158 = int_to_ptr.vmem [resolvable:$true] %s157
      %163 = dma.hbm_to_vmem [thread:$0]  %s14, 256, %s158, [#allocation20], 64, 64, 4
    $region61: #{inversion_plm_mlc_forward.1} parent=1 // pred_fallthru
      _
    // Predicated region
    $region62: #{inversion_plm_mlc_forward.1} parent=1 // pred_check
      _
    $region63: #{inversion_plm_mlc_forward.1} parent=1 // pred_check_branch
      %165 = sbr.rel (0) target = $region65
    $region64: #{inversion_plm_mlc_forward.1} parent=1 // pred_region
      %s167 = ssub.s32 16, 16
      %168 = vsyncadd [#allocation23], %s167
      %s170 = sshll.u32 [#allocation22], 4
      %s171 = int_to_ptr.vmem [resolvable:$true] %s170
      %173 = dma.hbm_to_vmem [thread:$0]  %s15, 16, %s171, [#allocation23]
    $region65: #{inversion_plm_mlc_forward.1} parent=1 // pred_fallthru
      _
    // Predicated region
    $region66: #{inversion_plm_mlc_forward.1} parent=1 // pred_check
      _
    $region67: #{inversion_plm_mlc_forward.1} parent=1 // pred_check_branch
      %175 = sbr.rel (0) target = $region69
    $region68: #{inversion_plm_mlc_forward.1} parent=1 // pred_region
      %s177 = ssub.s32 32, 32
      %178 = vsyncadd [#allocation23], %s177
      %s180 = sshll.u32 [#allocation24], 4
      %s181 = int_to_ptr.vmem [resolvable:$true] %s180
      %183 = dma.hbm_to_vmem [thread:$0]  %s16, 32, %s181, [#allocation23]
    $region69: #{inversion_plm_mlc_forward.1} parent=1 // pred_fallthru
      _
    // Predicated region
    $region70: #{inversion_plm_mlc_forward.1} parent=1 // pred_check
      _
    $region71: #{inversion_plm_mlc_forward.1} parent=1 // pred_check_branch
      %185 = sbr.rel (0) target = $region73
    $region72: #{inversion_plm_mlc_forward.1} parent=1 // pred_region
      _
    $region73: #{inversion_plm_mlc_forward.1} parent=1 // pred_fallthru
      _
    // Predicated region
    $region74: #{inversion_plm_mlc_forward.1} parent=1 // pred_check
      _
    $region75: #{inversion_plm_mlc_forward.1} parent=1 // pred_check_branch
      %187 = sbr.rel (0) target = $region77
    $region76: #{inversion_plm_mlc_forward.1} parent=1 // pred_region
      %s189 = ssub.s32 64, 64
      %190 = vsyncadd [#allocation26], %s189
      %s192 = sshll.u32 [#allocation25], 4
      %s193 = int_to_ptr.vmem [resolvable:$true] %s192
      %195 = dma.hbm_to_vmem [thread:$0]  %s18, 64, %s193, [#allocation26]
    $region77: #{inversion_plm_mlc_forward.1} parent=1 // pred_fallthru
      _
    // Predicated region
    $region78: #{inversion_plm_mlc_forward.1} parent=1 // pred_check
      _
    $region79: #{inversion_plm_mlc_forward.1} parent=1 // pred_check_branch
      %197 = sbr.rel (0) target = $region81
    $region80: #{inversion_plm_mlc_forward.1} parent=1 // pred_region
      %198 = dma.done [#allocation5], 16
    $region81: #{inversion_plm_mlc_forward.1} parent=1 // pred_fallthru
      _
    // Predicated region
    $region82: #{inversion_plm_mlc_forward.1} parent=1 // pred_check
      _
    $region83: #{inversion_plm_mlc_forward.1} parent=1 // pred_check_branch
      %200 = sbr.rel (0) target = $region85
    $region84: #{inversion_plm_mlc_forward.1} parent=1 // pred_region
      %201 = dma.done [#allocation8], 256
    $region85: #{inversion_plm_mlc_forward.1} parent=1 // pred_fallthru
      _
    // Predicated region
    $region86: #{inversion_plm_mlc_forward.1} parent=1 // pred_check
      _
    $region87: #{inversion_plm_mlc_forward.1} parent=1 // pred_check_branch
      %203 = sbr.rel (0) target = $region89
    $region88: #{inversion_plm_mlc_forward.1} parent=1 // pred_region
      %204 = dma.done [#allocation8], 16
    $region89: #{inversion_plm_mlc_forward.1} parent=1 // pred_fallthru
      _
    // Predicated region
    $region90: #{inversion_plm_mlc_forward.1} parent=1 // pred_check
      _
    $region91: #{inversion_plm_mlc_forward.1} parent=1 // pred_check_branch
      %206 = sbr.rel (0) target = $region93
    $region92: #{inversion_plm_mlc_forward.1} parent=1 // pred_region
      %207 = dma.done [#allocation11], 16
    $region93: #{inversion_plm_mlc_forward.1} parent=1 // pred_fallthru
      _
    // Predicated region
    $region94: #{inversion_plm_mlc_forward.1} parent=1 // pred_check
      _
    $region95: #{inversion_plm_mlc_forward.1} parent=1 // pred_check_branch
      %209 = sbr.rel (0) target = $region97
    $region96: #{inversion_plm_mlc_forward.1} parent=1 // pred_region
      %210 = dma.done [#allocation11], 256
    $region97: #{inversion_plm_mlc_forward.1} parent=1 // pred_fallthru
      _
    // Predicated region
    $region98: #{inversion_plm_mlc_forward.1} parent=1 // pred_check
      _
    $region99: #{inversion_plm_mlc_forward.1} parent=1 // pred_check_branch
      %212 = sbr.rel (0) target = $region101
    $region100: #{inversion_plm_mlc_forward.1} parent=1 // pred_region
      %213 = dma.done [#allocation14], 16
    $region101: #{inversion_plm_mlc_forward.1} parent=1 // pred_fallthru
      _
    // Predicated region
    $region102: #{inversion_plm_mlc_forward.1} parent=1 // pred_check
      _
    $region103: #{inversion_plm_mlc_forward.1} parent=1 // pred_check_branch
      %215 = sbr.rel (0) target = $region105
    $region104: #{inversion_plm_mlc_forward.1} parent=1 // pred_region
      %216 = dma.done [#allocation14], 256
    $region105: #{inversion_plm_mlc_forward.1} parent=1 // pred_fallthru
      _
    // Predicated region
    $region106: #{inversion_plm_mlc_forward.1} parent=1 // pred_check
      _
    $region107: #{inversion_plm_mlc_forward.1} parent=1 // pred_check_branch
      %218 = sbr.rel (0) target = $region109
    $region108: #{inversion_plm_mlc_forward.1} parent=1 // pred_region
      %219 = dma.done [#allocation17], 16
    $region109: #{inversion_plm_mlc_forward.1} parent=1 // pred_fallthru
      _
    // Predicated region
    $region110: #{inversion_plm_mlc_forward.1} parent=1 // pred_check
      _
    $region111: #{inversion_plm_mlc_forward.1} parent=1 // pred_check_branch
      %221 = sbr.rel (0) target = $region113
    $region112: #{inversion_plm_mlc_forward.1} parent=1 // pred_region
      %222 = dma.done [#allocation17], 16
    $region113: #{inversion_plm_mlc_forward.1} parent=1 // pred_fallthru
      _
    // Predicated region
    $region114: #{inversion_plm_mlc_forward.1} parent=1 // pred_check
      _
    $region115: #{inversion_plm_mlc_forward.1} parent=1 // pred_check_branch
      %224 = sbr.rel (0) target = $region117
    $region116: #{inversion_plm_mlc_forward.1} parent=1 // pred_region
      %225 = dma.done [#allocation20], 96
    $region117: #{inversion_plm_mlc_forward.1} parent=1 // pred_fallthru
      _
    // Predicated region
    $region118: #{inversion_plm_mlc_forward.1} parent=1 // pred_check
      _
    $region119: #{inversion_plm_mlc_forward.1} parent=1 // pred_check_branch
      %227 = sbr.rel (0) target = $region121
    $region120: #{inversion_plm_mlc_forward.1} parent=1 // pred_region
      %228 = dma.done [#allocation20], 256
    $region121: #{inversion_plm_mlc_forward.1} parent=1 // pred_fallthru
      _
    // Predicated region
    $region122: #{inversion_plm_mlc_forward.1} parent=1 // pred_check
      _
    $region123: #{inversion_plm_mlc_forward.1} parent=1 // pred_check_branch
      %230 = sbr.rel (0) target = $region125
    $region124: #{inversion_plm_mlc_forward.1} parent=1 // pred_region
      %231 = dma.done [#allocation23], 16
    $region125: #{inversion_plm_mlc_forward.1} parent=1 // pred_fallthru
      _
    // Predicated region
    $region126: #{inversion_plm_mlc_forward.1} parent=1 // pred_check
      _
    $region127: #{inversion_plm_mlc_forward.1} parent=1 // pred_check_branch
      %233 = sbr.rel (0) target = $region129
    $region128: #{inversion_plm_mlc_forward.1} parent=1 // pred_region
      %234 = dma.done [#allocation23], 32
    $region129: #{inversion_plm_mlc_forward.1} parent=1 // pred_fallthru
      _
    // Predicated region
    $region130: #{inversion_plm_mlc_forward.1} parent=1 // pred_check
      _
    $region131: #{inversion_plm_mlc_forward.1} parent=1 // pred_check_branch
      %236 = sbr.rel (0) target = $region133
    $region132: #{inversion_plm_mlc_forward.1} parent=1 // pred_region
      %237 = dma.done [#allocation26], 64
    $region133: #{inversion_plm_mlc_forward.1} parent=1 // pred_fallthru
      _
    %p239 = scmp.eq.s32.totalorder 0, 0
    // Predicated region
    $region134: #{inversion_plm_mlc_forward.1} parent=1 // pred_check
      %p240 = pneg %p239
    $region135: #{inversion_plm_mlc_forward.1} parent=1 // pred_check_branch
      %242 = sbr.rel (%p240) target = $region137
    $region136: #{inversion_plm_mlc_forward.1} parent=1 // pred_region
      %v243 = vld [vmem:[%s0] sm:$0xff]
      %v244 = vld [vmem:[%s0 + $0x8] sm:$0xff]
      %v245 = vpack.c.bf16 %v244, %v243
      %v246 = vld [vmem:[%s1] sm:$0xf]
      %v247 = vld [vmem:[%s1 + $0x4] sm:$0xf]
      %v248 = vld [vmem:[%s1 + $0x8] sm:$0xf]
      %v249 = vld [vmem:[%s1 + $0xc] sm:$0xf]
      %v250 = vld [vmem:[#allocation4] sm:$0x1]
      %v252 = vlaneseq
      %v253 = vshrl.u32 %v252, 7
      %v254 = vsub.s32 0, %v253
      %v255 = vrot.slane %v250, %v254
      %v261 = vunpack.c.l.b16 %v246
      %v262 = vunpack.c.l.b16 %v247
      %v263 = vunpack.c.l.b16 %v248
      %v264 = vunpack.c.l.b16 %v249
      %v265 = vpack.c.b16 %v262, %v261
      %v266 = vpack.c.b16 %v264, %v263
      %vm269 = vcmask 261120
      %v271 = vsel %vm269, %v245, 0
      %273 = vmatprep.subr.bf16.mxu0 0
      %274 = vmatpush1.bf16.msra.mxu0 0
      %275 = vmatprep.subr.bf16.mxu0 0
      %276 = vmatpush1.bf16.msra.mxu0 0
      %277 = vmatprep.subr.bf16.mxu0 0
      %278 = vmatpush1.bf16.msra.mxu0 0
      %279 = vmatprep.subr.bf16.mxu0 0
      %280 = vmatpush1.bf16.msra.mxu0 0
      %281 = vmatprep.subr.bf16.mxu0 0
      %282 = vmatpush1.bf16.msra.mxu0 0
      %283 = vmatprep.subr.bf16.mxu0 0
      %284 = vmatpush1.bf16.msra.mxu0 0
      %285 = vmatprep.subr.bf16.mxu0 0
      %286 = vmatpush1.bf16.msra.mxu0 %v266
      %287 = vmatprep.subr.bf16.mxu0 0
      %288 = vmatpush1.bf16.msra.mxu0 %v265
      %289 = vmatprep.subr.bf16.mxu0 0
      %290 = vmatpush2.bf16.msra.mxu0 0
      %291 = vmatprep.subr.bf16.mxu0 0
      %292 = vmatpush2.bf16.msra.mxu0 0
      %293 = vmatprep.subr.bf16.mxu0 0
      %294 = vmatpush2.bf16.msra.mxu0 0
      %295 = vmatprep.subr.bf16.mxu0 0
      %296 = vmatpush2.bf16.msra.mxu0 0
      %297 = vmatprep.subr.bf16.mxu0 0
      %298 = vmatpush2.bf16.msra.mxu0 0
      %299 = vmatprep.subr.bf16.mxu0 0
      %300 = vmatpush2.bf16.msra.mxu0 0
      %301 = vmatprep.subr.bf16.mxu0 0
      %302 = vmatpush2.bf16.msra.mxu0 0
      %303 = vmatprep.subr.bf16.mxu0 0
      %304 = vmatpush2.bf16.msra.mxu0 0
      %305 = vmatprep.mubr.bf16.mxu0 0
      %306 = vmatmul.mubr.bf16.gmra.mxu0 %v271
      %v307 = vpop.f32.mrf.mxu0
      %v308 = vadd.f32 %v255, %v307
      %v309 = vpop.f32.mrf.mxu0
      %v310 = vpop.f32.mrf.mxu0
      %v311 = vadd.f32 %v255, %v310
      %v312 = vpop.f32.mrf.mxu0
      %313 = vdwg.mxu0
      %v314 = vld [vmem:[#allocation7] sm:$0xf]
      %v315 = vld [vmem:[#allocation7 + $0x4] sm:$0xf]
      %v316 = vld [vmem:[#allocation7 + $0x8] sm:$0xf]
      %v317 = vld [vmem:[#allocation7 + $0xc] sm:$0xf]
      %v318 = vld [vmem:[#allocation9] sm:$0x1]
      %v320 = vlaneseq
      %v321 = vshrl.u32 %v320, 7
      %v322 = vsub.s32 0, %v321
      %v323 = vrot.slane %v318, %v322
      %v329 = vunpack.c.l.b16 %v314
      %v330 = vunpack.c.l.b16 %v315
      %v331 = vunpack.c.l.b16 %v316
      %v332 = vunpack.c.l.b16 %v317
      %v333 = vpack.c.b16 %v330, %v329
      %v334 = vpack.c.b16 %v332, %v331
      %337 = vmatprep.subr.bf16.mxu0 0
      %338 = vmatpush1.bf16.msra.mxu0 0
      %339 = vmatprep.subr.bf16.mxu0 0
      %340 = vmatpush1.bf16.msra.mxu0 0
      %341 = vmatprep.subr.bf16.mxu0 0
      %342 = vmatpush1.bf16.msra.mxu0 0
      %343 = vmatprep.subr.bf16.mxu0 0
      %344 = vmatpush1.bf16.msra.mxu0 0
      %345 = vmatprep.subr.bf16.mxu0 0
      %346 = vmatpush1.bf16.msra.mxu0 0
      %347 = vmatprep.subr.bf16.mxu0 0
      %348 = vmatpush1.bf16.msra.mxu0 0
      %349 = vmatprep.subr.bf16.mxu0 0
      %350 = vmatpush1.bf16.msra.mxu0 %v334
      %351 = vmatprep.subr.bf16.mxu0 0
      %352 = vmatpush1.bf16.msra.mxu0 %v333
      %353 = vmatprep.subr.bf16.mxu0 0
      %354 = vmatpush2.bf16.msra.mxu0 0
      %355 = vmatprep.subr.bf16.mxu0 0
      %356 = vmatpush2.bf16.msra.mxu0 0
      %357 = vmatprep.subr.bf16.mxu0 0
      %358 = vmatpush2.bf16.msra.mxu0 0
      %359 = vmatprep.subr.bf16.mxu0 0
      %360 = vmatpush2.bf16.msra.mxu0 0
      %361 = vmatprep.subr.bf16.mxu0 0
      %362 = vmatpush2.bf16.msra.mxu0 0
      %363 = vmatprep.subr.bf16.mxu0 0
      %364 = vmatpush2.bf16.msra.mxu0 0
      %365 = vmatprep.subr.bf16.mxu0 0
      %366 = vmatpush2.bf16.msra.mxu0 0
      %367 = vmatprep.subr.bf16.mxu0 0
      %368 = vmatpush2.bf16.msra.mxu0 0
      %369 = vmatprep.mubr.bf16.mxu0 0
      %370 = vmatmul.mubr.bf16.gmra.mxu0 %v271
      %v371 = vpop.f32.mrf.mxu0
      %v372 = vadd.f32 %v323, %v371
      %v373 = vpop.f32.mrf.mxu0
      %v374 = vpop.f32.mrf.mxu0
      %v375 = vadd.f32 %v323, %v374
      %v376 = vpop.f32.mrf.mxu0
      %377 = vdwg.mxu0
      %v378 = vld [vmem:[%s5] sm:$0xf]
      %v379 = vld [vmem:[%s5 + $0x4] sm:$0xf]
      %v380 = vld [vmem:[%s5 + $0x8] sm:$0xf]
      %v381 = vld [vmem:[%s5 + $0xc] sm:$0xf]
      %v382 = vld [vmem:[#allocation10] sm:$0x1]
      %v384 = vlaneseq
      %v385 = vshrl.u32 %v384, 7
      %v386 = vsub.s32 0, %v385
      %v387 = vrot.slane %v382, %v386
      %v393 = vunpack.c.l.b16 %v378
      %v394 = vunpack.c.l.b16 %v379
      %v395 = vunpack.c.l.b16 %v380
      %v396 = vunpack.c.l.b16 %v381
      %v397 = vpack.c.b16 %v394, %v393
      %v398 = vpack.c.b16 %v396, %v395
      %401 = vmatprep.subr.bf16.mxu0 0
      %402 = vmatpush1.bf16.msra.mxu0 0
      %403 = vmatprep.subr.bf16.mxu0 0
      %404 = vmatpush1.bf16.msra.mxu0 0
      %405 = vmatprep.subr.bf16.mxu0 0
      %406 = vmatpush1.bf16.msra.mxu0 0
      %407 = vmatprep.subr.bf16.mxu0 0
      %408 = vmatpush1.bf16.msra.mxu0 0
      %409 = vmatprep.subr.bf16.mxu0 0
      %410 = vmatpush1.bf16.msra.mxu0 0
      %411 = vmatprep.subr.bf16.mxu0 0
      %412 = vmatpush1.bf16.msra.mxu0 0
      %413 = vmatprep.subr.bf16.mxu0 0
      %414 = vmatpush1.bf16.msra.mxu0 %v398
      %415 = vmatprep.subr.bf16.mxu0 0
      %416 = vmatpush1.bf16.msra.mxu0 %v397
      %417 = vmatprep.subr.bf16.mxu0 0
      %418 = vmatpush2.bf16.msra.mxu0 0
      %419 = vmatprep.subr.bf16.mxu0 0
      %420 = vmatpush2.bf16.msra.mxu0 0
      %421 = vmatprep.subr.bf16.mxu0 0
      %422 = vmatpush2.bf16.msra.mxu0 0
      %423 = vmatprep.subr.bf16.mxu0 0
      %424 = vmatpush2.bf16.msra.mxu0 0
      %425 = vmatprep.subr.bf16.mxu0 0
      %426 = vmatpush2.bf16.msra.mxu0 0
      %427 = vmatprep.subr.bf16.mxu0 0
      %428 = vmatpush2.bf16.msra.mxu0 0
      %429 = vmatprep.subr.bf16.mxu0 0
      %430 = vmatpush2.bf16.msra.mxu0 0
      %431 = vmatprep.subr.bf16.mxu0 0
      %432 = vmatpush2.bf16.msra.mxu0 0
      %433 = vmatprep.mubr.bf16.mxu0 0
      %434 = vmatmul.mubr.bf16.gmra.mxu0 %v271
      %v435 = vpop.f32.mrf.mxu0
      %v436 = vadd.f32 %v387, %v435
      %v437 = vpop.f32.mrf.mxu0
      %v438 = vpop.f32.mrf.mxu0
      %v439 = vadd.f32 %v387, %v438
      %v440 = vpop.f32.mrf.mxu0
      %441 = vdwg.mxu0
      %v442 = vpack.c.bf16 %v308, %v308
      %v443 = vpack.c.bf16 %v311, %v311
      %v444 = vpack.c.bf16 %v372, %v372
      %v445 = vpack.c.bf16 %v375, %v375
      %v447 = vsel %vm269, %v442, 0
      %v450 = vsel %vm269, %v444, 0
      %452 = vmatprep.subr.bf16.mxu0 0
      %453 = vmatpush1.bf16.xpose.msra.mxu0 0
      %454 = vmatprep.subr.bf16.mxu0 0
      %455 = vmatpush1.bf16.xpose.msra.mxu0 0
      %456 = vmatprep.subr.bf16.mxu0 0
      %457 = vmatpush1.bf16.xpose.msra.mxu0 0
      %458 = vmatprep.subr.bf16.mxu0 0
      %459 = vmatpush1.bf16.xpose.msra.mxu0 0
      %460 = vmatprep.subr.bf16.mxu0 0
      %461 = vmatpush1.bf16.xpose.msra.mxu0 0
      %462 = vmatprep.subr.bf16.mxu0 0
      %463 = vmatpush1.bf16.xpose.msra.mxu0 0
      %464 = vmatprep.subr.bf16.mxu0 0
      %465 = vmatpush1.bf16.xpose.msra.mxu0 0
      %466 = vmatprep.subr.bf16.mxu0 0
      %467 = vmatpush1.bf16.xpose.msra.mxu0 %v450
      %468 = vmatprep.subr.bf16.mxu0 0
      %469 = vmatpush2.bf16.xpose.msra.mxu0 0
      %470 = vmatprep.subr.bf16.mxu0 0
      %471 = vmatpush2.bf16.xpose.msra.mxu0 0
      %472 = vmatprep.subr.bf16.mxu0 0
      %473 = vmatpush2.bf16.xpose.msra.mxu0 0
      %474 = vmatprep.subr.bf16.mxu0 0
      %475 = vmatpush2.bf16.xpose.msra.mxu0 0
      %476 = vmatprep.subr.bf16.mxu0 0
      %477 = vmatpush2.bf16.xpose.msra.mxu0 0
      %478 = vmatprep.subr.bf16.mxu0 0
      %479 = vmatpush2.bf16.xpose.msra.mxu0 0
      %480 = vmatprep.subr.bf16.mxu0 0
      %481 = vmatpush2.bf16.xpose.msra.mxu0 0
      %482 = vmatprep.subr.bf16.mxu0 0
      %483 = vmatpush2.bf16.xpose.msra.mxu0 0
      %484 = vmatprep.mubr.bf16.mxu0 0
      %485 = vmatmul.mubr.bf16.gmra.mxu0 %v447
      %v486 = vpop.f32.mrf.mxu0
      %v487 = vadd.f32 0.0, %v486
      %v488 = vpop.f32.mrf.mxu0
      %v489 = vpop.f32.mrf.mxu0
      %v490 = vpop.f32.mrf.mxu0
      %491 = vdwg.mxu0
      %v493 = vsel %vm269, %v443, 0
      %v496 = vsel %vm269, %v445, 0
      %498 = vmatprep.subr.bf16.mxu0 0
      %499 = vmatpush1.bf16.xpose.msra.mxu0 0
      %500 = vmatprep.subr.bf16.mxu0 0
      %501 = vmatpush1.bf16.xpose.msra.mxu0 0
      %502 = vmatprep.subr.bf16.mxu0 0
      %503 = vmatpush1.bf16.xpose.msra.mxu0 0
      %504 = vmatprep.subr.bf16.mxu0 0
      %505 = vmatpush1.bf16.xpose.msra.mxu0 0
      %506 = vmatprep.subr.bf16.mxu0 0
      %507 = vmatpush1.bf16.xpose.msra.mxu0 0
      %508 = vmatprep.subr.bf16.mxu0 0
      %509 = vmatpush1.bf16.xpose.msra.mxu0 0
      %510 = vmatprep.subr.bf16.mxu0 0
      %511 = vmatpush1.bf16.xpose.msra.mxu0 0
      %512 = vmatprep.subr.bf16.mxu0 0
      %513 = vmatpush1.bf16.xpose.msra.mxu0 %v496
      %514 = vmatprep.subr.bf16.mxu0 0
      %515 = vmatpush2.bf16.xpose.msra.mxu0 0
      %516 = vmatprep.subr.bf16.mxu0 0
      %517 = vmatpush2.bf16.xpose.msra.mxu0 0
      %518 = vmatprep.subr.bf16.mxu0 0
      %519 = vmatpush2.bf16.xpose.msra.mxu0 0
      %520 = vmatprep.subr.bf16.mxu0 0
      %521 = vmatpush2.bf16.xpose.msra.mxu0 0
      %522 = vmatprep.subr.bf16.mxu0 0
      %523 = vmatpush2.bf16.xpose.msra.mxu0 0
      %524 = vmatprep.subr.bf16.mxu0 0
      %525 = vmatpush2.bf16.xpose.msra.mxu0 0
      %526 = vmatprep.subr.bf16.mxu0 0
      %527 = vmatpush2.bf16.xpose.msra.mxu0 0
      %528 = vmatprep.subr.bf16.mxu0 0
      %529 = vmatpush2.bf16.xpose.msra.mxu0 0
      %530 = vmatprep.mubr.bf16.mxu0 0
      %531 = vmatmul.mubr.bf16.gmra.mxu0 %v493
      %v532 = vpop.f32.mrf.mxu0
      %v533 = vadd.f32 0.0, %v532
      %v534 = vpop.f32.mrf.mxu0
      %v535 = vpop.f32.mrf.mxu0
      %v536 = vpop.f32.mrf.mxu0
      %537 = vdwg.mxu0
      %v538 = vmul.f32 %v487, 0.17677669
      %v539 = vmul.f32 %v533, 0.17677669
      %vm540 = vcmask 64512
      %v541 = vsel %vm540, %v538, -inf
      %542 = vmax.xlane.f32.xlu0 %v541
      %v543 = vpop.xlane.xlu0 %542
      %v544 = vsel %vm540, %v539, -inf
      %545 = vmax.xlane.f32.xlu0 %v544
      %v546 = vpop.xlane.xlu0 %545
      %v547 = vsub.f32 %v538, %v543
      %v548 = vsub.f32 %v539, %v546
      %v549 = vmul.f32 %v547, 1.442695
      %v550 = vpow.pop %v549
      %v551 = vmul.f32 %v548, 1.442695
      %v552 = vpow.pop %v551
      %v553 = vsel %vm540, %v550, 0.0
      %554 = vadd.xlane.f32.xlu0 %v553
      %v555 = vpop.xlane.xlu0 %554
      %v556 = vsel %vm540, %v552, 0.0
      %557 = vadd.xlane.f32.xlu0 %v556
      %v558 = vpop.xlane.xlu0 %557
      %v559 = vrcp.pop %v555
      %v560 = vmul.f32 %v550, %v559
      %v561 = vrcp.pop %v558
      %v562 = vmul.f32 %v552, %v561
      %v563 = vpack.c.bf16 %v560, %v560
      %v564 = vpack.c.bf16 %v562, %v562
      %v565 = vpack.c.bf16 %v436, %v436
      %v566 = vpack.c.bf16 %v439, %v439
      %v568 = vsel %vm540, %v563, 0
      %vm570 = vcmask 1043456
      %v572 = vsel %vm570, %v565, 0
      %574 = vmatprep.subr.bf16.mxu0 0
      %575 = vmatpush1.bf16.msra.mxu0 0
      %576 = vmatprep.subr.bf16.mxu0 0
      %577 = vmatpush1.bf16.msra.mxu0 0
      %578 = vmatprep.subr.bf16.mxu0 0
      %579 = vmatpush1.bf16.msra.mxu0 0
      %580 = vmatprep.subr.bf16.mxu0 0
      %581 = vmatpush1.bf16.msra.mxu0 0
      %582 = vmatprep.subr.bf16.mxu0 0
      %583 = vmatpush1.bf16.msra.mxu0 0
      %584 = vmatprep.subr.bf16.mxu0 0
      %585 = vmatpush1.bf16.msra.mxu0 0
      %586 = vmatprep.subr.bf16.mxu0 0
      %587 = vmatpush1.bf16.msra.mxu0 0
      %588 = vmatprep.subr.bf16.mxu0 0
      %589 = vmatpush1.bf16.msra.mxu0 %v572
      %590 = vmatprep.subr.bf16.mxu0 0
      %591 = vmatpush2.bf16.msra.mxu0 0
      %592 = vmatprep.subr.bf16.mxu0 0
      %593 = vmatpush2.bf16.msra.mxu0 0
      %594 = vmatprep.subr.bf16.mxu0 0
      %595 = vmatpush2.bf16.msra.mxu0 0
      %596 = vmatprep.subr.bf16.mxu0 0
      %597 = vmatpush2.bf16.msra.mxu0 0
      %598 = vmatprep.subr.bf16.mxu0 0
      %599 = vmatpush2.bf16.msra.mxu0 0
      %600 = vmatprep.subr.bf16.mxu0 0
      %601 = vmatpush2.bf16.msra.mxu0 0
      %602 = vmatprep.subr.bf16.mxu0 0
      %603 = vmatpush2.bf16.msra.mxu0 0
      %604 = vmatprep.subr.bf16.mxu0 0
      %605 = vmatpush2.bf16.msra.mxu0 0
      %606 = vmatprep.mubr.bf16.mxu0 0
      %607 = vmatmul.mubr.bf16.gmra.mxu0 %v568
      %v608 = vpop.f32.mrf.mxu0
      %v609 = vadd.f32 0.0, %v608
      %v610 = vpop.f32.mrf.mxu0
      %v611 = vpop.f32.mrf.mxu0
      %v612 = vpop.f32.mrf.mxu0
      %613 = vdwg.mxu0
      %v615 = vsel %vm540, %v564, 0
      %v618 = vsel %vm570, %v566, 0
      %620 = vmatprep.subr.bf16.mxu0 0
      %621 = vmatpush1.bf16.msra.mxu0 0
      %622 = vmatprep.subr.bf16.mxu0 0
      %623 = vmatpush1.bf16.msra.mxu0 0
      %624 = vmatprep.subr.bf16.mxu0 0
      %625 = vmatpush1.bf16.msra.mxu0 0
      %626 = vmatprep.subr.bf16.mxu0 0
      %627 = vmatpush1.bf16.msra.mxu0 0
      %628 = vmatprep.subr.bf16.mxu0 0
      %629 = vmatpush1.bf16.msra.mxu0 0
      %630 = vmatprep.subr.bf16.mxu0 0
      %631 = vmatpush1.bf16.msra.mxu0 0
      %632 = vmatprep.subr.bf16.mxu0 0
      %633 = vmatpush1.bf16.msra.mxu0 0
      %634 = vmatprep.subr.bf16.mxu0 0
      %635 = vmatpush1.bf16.msra.mxu0 %v618
      %636 = vmatprep.subr.bf16.mxu0 0
      %637 = vmatpush2.bf16.msra.mxu0 0
      %638 = vmatprep.subr.bf16.mxu0 0
      %639 = vmatpush2.bf16.msra.mxu0 0
      %640 = vmatprep.subr.bf16.mxu0 0
      %641 = vmatpush2.bf16.msra.mxu0 0
      %642 = vmatprep.subr.bf16.mxu0 0
      %643 = vmatpush2.bf16.msra.mxu0 0
      %644 = vmatprep.subr.bf16.mxu0 0
      %645 = vmatpush2.bf16.msra.mxu0 0
      %646 = vmatprep.subr.bf16.mxu0 0
      %647 = vmatpush2.bf16.msra.mxu0 0
      %648 = vmatprep.subr.bf16.mxu0 0
      %649 = vmatpush2.bf16.msra.mxu0 0
      %650 = vmatprep.subr.bf16.mxu0 0
      %651 = vmatpush2.bf16.msra.mxu0 0
      %652 = vmatprep.mubr.bf16.mxu0 0
      %653 = vmatmul.mubr.bf16.gmra.mxu0 %v615
      %v654 = vpop.f32.mrf.mxu0
      %v655 = vadd.f32 0.0, %v654
      %v656 = vpop.f32.mrf.mxu0
      %v657 = vpop.f32.mrf.mxu0
      %v658 = vpop.f32.mrf.mxu0
      %659 = vdwg.mxu0
      %v660 = vpack.c.bf16 %v655, %v609
      %v661 = vld [vmem:[#allocation12] sm:$0xf]
      %v662 = vld [vmem:[#allocation12 + $0x4] sm:$0xf]
      %v663 = vld [vmem:[#allocation12 + $0x8] sm:$0xf]
      %v664 = vld [vmem:[#allocation12 + $0xc] sm:$0xf]
      %v665 = vld [vmem:[#allocation13] sm:$0x1]
      %v667 = vlaneseq
      %v668 = vshrl.u32 %v667, 7
      %v669 = vsub.s32 0, %v668
      %v670 = vrot.slane %v665, %v669
      %v676 = vunpack.c.l.b16 %v661
      %v677 = vunpack.c.l.b16 %v662
      %v678 = vunpack.c.l.b16 %v663
      %v679 = vunpack.c.l.b16 %v664
      %v680 = vpack.c.b16 %v677, %v676
      %v681 = vpack.c.b16 %v679, %v678
      %v685 = vsel %vm269, %v660, 0
      %687 = vmatprep.subr.bf16.mxu0 0
      %688 = vmatpush1.bf16.msra.mxu0 0
      %689 = vmatprep.subr.bf16.mxu0 0
      %690 = vmatpush1.bf16.msra.mxu0 0
      %691 = vmatprep.subr.bf16.mxu0 0
      %692 = vmatpush1.bf16.msra.mxu0 0
      %693 = vmatprep.subr.bf16.mxu0 0
      %694 = vmatpush1.bf16.msra.mxu0 0
      %695 = vmatprep.subr.bf16.mxu0 0
      %696 = vmatpush1.bf16.msra.mxu0 0
      %697 = vmatprep.subr.bf16.mxu0 0
      %698 = vmatpush1.bf16.msra.mxu0 0
      %699 = vmatprep.subr.bf16.mxu0 0
      %700 = vmatpush1.bf16.msra.mxu0 %v681
      %701 = vmatprep.subr.bf16.mxu0 0
      %702 = vmatpush1.bf16.msra.mxu0 %v680
      %703 = vmatprep.subr.bf16.mxu0 0
      %704 = vmatpush2.bf16.msra.mxu0 0
      %705 = vmatprep.subr.bf16.mxu0 0
      %706 = vmatpush2.bf16.msra.mxu0 0
      %707 = vmatprep.subr.bf16.mxu0 0
      %708 = vmatpush2.bf16.msra.mxu0 0
      %709 = vmatprep.subr.bf16.mxu0 0
      %710 = vmatpush2.bf16.msra.mxu0 0
      %711 = vmatprep.subr.bf16.mxu0 0
      %712 = vmatpush2.bf16.msra.mxu0 0
      %713 = vmatprep.subr.bf16.mxu0 0
      %714 = vmatpush2.bf16.msra.mxu0 0
      %715 = vmatprep.subr.bf16.mxu0 0
      %716 = vmatpush2.bf16.msra.mxu0 0
      %717 = vmatprep.subr.bf16.mxu0 0
      %718 = vmatpush2.bf16.msra.mxu0 0
      %719 = vmatprep.mubr.bf16.mxu0 0
      %720 = vmatmul.mubr.bf16.gmra.mxu0 %v685
      %v721 = vpop.f32.mrf.mxu0
      %v722 = vadd.f32 %v670, %v721
      %v723 = vpop.f32.mrf.mxu0
      %v724 = vpop.f32.mrf.mxu0
      %v725 = vadd.f32 %v670, %v724
      %v726 = vpop.f32.mrf.mxu0
      %727 = vdwg.mxu0
      %v728 = vadd.f32 %v243, %v722
      %v729 = vadd.f32 %v244, %v725
      %v730 = vld [vmem:[#allocation19] sm:$0x1]
      %s731 = scalar_lea.vmem [#allocation19], 1
      %v732 = vld [vmem:[%s731] sm:$0x1]
      %v733 = vsel %vm269, %v728, 0.0
      %734 = vadd.xlane.f32.xlu0 %v733
      %v735 = vpop.xlane.xlu0 %734
      %v736 = vsel %vm269, %v729, 0.0
      %737 = vadd.xlane.f32.xlu0 %v736
      %v738 = vpop.xlane.xlu0 %737
      %v739 = vrcp.pop 32.0
      %v740 = vmul.f32 %v735, %v739
      %v741 = vmul.f32 %v738, %v739
      %v742 = vsub.f32 %v728, %v740
      %v743 = vsub.f32 %v729, %v741
      %v744 = vmul.f32 %v742, %v742
      %v745 = vmul.f32 %v743, %v743
      %v746 = vsel %vm269, %v744, 0.0
      %747 = vadd.xlane.f32.xlu0 %v746
      %v748 = vpop.xlane.xlu0 %747
      %v749 = vsel %vm269, %v745, 0.0
      %750 = vadd.xlane.f32.xlu0 %v749
      %v751 = vpop.xlane.xlu0 %750
      %v752 = vmul.f32 %v748, %v739
      %v753 = vmul.f32 %v751, %v739
      %v754 = vadd.f32 %v752, 1e-05
      %v755 = vadd.f32 %v753, 1e-05
      %v756 = vrsqrt.pop %v754
      %v757 = vmul.f32 %v754, %v756
      %vm758 = vcmp.eq.f32.partialorder %v754, inf
      %v759 = vsel %vm758, %v754, %v757
      %vm760 = vcmp.eq.f32.partialorder %v754, 0.0
      %v761 = vand.u32 %v754, 2147483648
      %v762 = vsel %vm760, %v761, %v759
      %v763 = vrsqrt.pop %v755
      %v764 = vmul.f32 %v755, %v763
      %vm765 = vcmp.eq.f32.partialorder %v755, inf
      %v766 = vsel %vm765, %v755, %v764
      %vm767 = vcmp.eq.f32.partialorder %v755, 0.0
      %v768 = vand.u32 %v755, 2147483648
      %v769 = vsel %vm767, %v768, %v766
      %v770 = vrcp.pop %v762
      %v771 = vmul.f32 %v742, %v770
      %v772 = vrcp.pop %v769
      %v773 = vmul.f32 %v743, %v772
      %v775 = vlaneseq
      %v776 = vshrl.u32 %v775, 7
      %v777 = vsub.s32 0, %v776
      %v778 = vrot.slane %v730, %v777
      %v780 = vmul.f32 %v771, %v778
      %v781 = vmul.f32 %v773, %v778
      %v783 = vlaneseq
      %v784 = vshrl.u32 %v783, 7
      %v785 = vsub.s32 0, %v784
      %v786 = vrot.slane %v732, %v785
      %v788 = vadd.f32 %v780, %v786
      %v789 = vadd.f32 %v781, %v786
      %v790 = vpack.c.bf16 %v789, %v788
      %v791 = vld [vmem:[#allocation15] sm:$0xf]
      %v792 = vld [vmem:[#allocation15 + $0x4] sm:$0xf]
      %v793 = vld [vmem:[#allocation15 + $0x8] sm:$0xf]
      %v794 = vld [vmem:[#allocation15 + $0xc] sm:$0xf]
      %v795 = vld [vmem:[#allocation16] sm:$0x1]
      %v797 = vlaneseq
      %v798 = vshrl.u32 %v797, 7
      %v799 = vsub.s32 0, %v798
      %v800 = vrot.slane %v795, %v799
      %v806 = vunpack.c.l.b16 %v791
      %v807 = vunpack.c.l.b16 %v792
      %v808 = vunpack.c.l.b16 %v793
      %v809 = vunpack.c.l.b16 %v794
      %v810 = vpack.c.b16 %v807, %v806
      %v811 = vpack.c.b16 %v809, %v808
      %v815 = vsel %vm269, %v790, 0
      %817 = vmatprep.subr.bf16.mxu0 0
      %818 = vmatpush1.bf16.msra.mxu0 0
      %819 = vmatprep.subr.bf16.mxu0 0
      %820 = vmatpush1.bf16.msra.mxu0 0
      %821 = vmatprep.subr.bf16.mxu0 0
      %822 = vmatpush1.bf16.msra.mxu0 0
      %823 = vmatprep.subr.bf16.mxu0 0
      %824 = vmatpush1.bf16.msra.mxu0 0
      %825 = vmatprep.subr.bf16.mxu0 0
      %826 = vmatpush1.bf16.msra.mxu0 0
      %827 = vmatprep.subr.bf16.mxu0 0
      %828 = vmatpush1.bf16.msra.mxu0 0
      %829 = vmatprep.subr.bf16.mxu0 0
      %830 = vmatpush1.bf16.msra.mxu0 %v811
      %831 = vmatprep.subr.bf16.mxu0 0
      %832 = vmatpush1.bf16.msra.mxu0 %v810
      %833 = vmatprep.subr.bf16.mxu0 0
      %834 = vmatpush2.bf16.msra.mxu0 0
      %835 = vmatprep.subr.bf16.mxu0 0
      %836 = vmatpush2.bf16.msra.mxu0 0
      %837 = vmatprep.subr.bf16.mxu0 0
      %838 = vmatpush2.bf16.msra.mxu0 0
      %839 = vmatprep.subr.bf16.mxu0 0
      %840 = vmatpush2.bf16.msra.mxu0 0
      %841 = vmatprep.subr.bf16.mxu0 0
      %842 = vmatpush2.bf16.msra.mxu0 0
      %843 = vmatprep.subr.bf16.mxu0 0
      %844 = vmatpush2.bf16.msra.mxu0 0
      %845 = vmatprep.subr.bf16.mxu0 0
      %846 = vmatpush2.bf16.msra.mxu0 0
      %847 = vmatprep.subr.bf16.mxu0 0
      %848 = vmatpush2.bf16.msra.mxu0 0
      %849 = vmatprep.mubr.bf16.mxu0 0
      %850 = vmatmul.mubr.bf16.gmra.mxu0 %v815
      %v851 = vpop.f32.mrf.mxu0
      %v852 = vadd.f32 %v800, %v851
      %v853 = vpop.f32.mrf.mxu0
      %v854 = vpop.f32.mrf.mxu0
      %v855 = vadd.f32 %v800, %v854
      %v856 = vpop.f32.mrf.mxu0
      %857 = vdwg.mxu0
      %v858 = vmul.f32 %v852, 0.5
      %v859 = vmul.f32 %v855, 0.5
      %v860 = vmul.f32 %v852, 0.044715
      %v861 = vmul.f32 %v855, 0.044715
      %v862 = vmul.f32 %v860, %v852
      %v863 = vmul.f32 %v861, %v855
      %v864 = vmul.f32 %v862, %v852
      %v865 = vmul.f32 %v863, %v855
      %v866 = vadd.f32 %v852, %v864
      %v867 = vadd.f32 %v855, %v865
      %v868 = vmul.f32 %v866, 0.7978846
      %v869 = vmul.f32 %v867, 0.7978846
      %v870 = vtanh.pop %v868
      %v871 = vtanh.pop %v869
      %v872 = vadd.f32 %v870, 1.0
      %v873 = vadd.f32 %v871, 1.0
      %v874 = vmul.f32 %v858, %v872
      %v875 = vmul.f32 %v859, %v873
      %v876 = vpack.c.bf16 %v875, %v874
      %v877 = vld [vmem:[%s11] sm:$0xf]
      %v878 = vld [vmem:[%s11 + $0x4] sm:$0xf]
      %v879 = vld [vmem:[%s11 + $0x8] sm:$0xf]
      %v880 = vld [vmem:[%s11 + $0xc] sm:$0xf]
      %v881 = vld [vmem:[%s11 + $0x10] sm:$0xf]
      %v882 = vld [vmem:[%s11 + $0x14] sm:$0xf]
      %v883 = vld [vmem:[%s11 + $0x18] sm:$0xf]
      %v884 = vld [vmem:[%s11 + $0x1c] sm:$0xf]
      %v885 = vld [vmem:[%s11 + $0x20] sm:$0xf]
      %v886 = vld [vmem:[%s11 + $0x24] sm:$0xf]
      %v887 = vld [vmem:[%s11 + $0x28] sm:$0xf]
      %v888 = vld [vmem:[%s11 + $0x2c] sm:$0xf]
      %v889 = vld [vmem:[%s11 + $0x30] sm:$0xf]
      %v890 = vld [vmem:[%s11 + $0x34] sm:$0xf]
      %v891 = vld [vmem:[%s11 + $0x38] sm:$0xf]
      %v892 = vld [vmem:[%s11 + $0x3c] sm:$0xf]
      %v893 = vld [vmem:[#allocation18] sm:$0x1]
      %v895 = vlaneseq
      %v896 = vshrl.u32 %v895, 7
      %v897 = vsub.s32 0, %v896
      %v898 = vrot.slane %v893, %v897
      %v916 = vunpack.c.l.b16 %v877
      %v917 = vunpack.c.l.b16 %v878
      %v918 = vunpack.c.l.b16 %v879
      %v919 = vunpack.c.l.b16 %v880
      %v920 = vunpack.c.l.b16 %v881
      %v921 = vunpack.c.l.b16 %v882
      %v922 = vunpack.c.l.b16 %v883
      %v923 = vunpack.c.l.b16 %v884
      %v924 = vunpack.c.l.b16 %v885
      %v925 = vunpack.c.l.b16 %v886
      %v926 = vunpack.c.l.b16 %v887
      %v927 = vunpack.c.l.b16 %v888
      %v928 = vunpack.c.l.b16 %v889
      %v929 = vunpack.c.l.b16 %v890
      %v930 = vunpack.c.l.b16 %v891
      %v931 = vunpack.c.l.b16 %v892
      %v932 = vpack.c.b16 %v917, %v916
      %v933 = vpack.c.b16 %v919, %v918
      %v934 = vpack.c.b16 %v921, %v920
      %v935 = vpack.c.b16 %v923, %v922
      %v936 = vpack.c.b16 %v925, %v924
      %v937 = vpack.c.b16 %v927, %v926
      %v938 = vpack.c.b16 %v929, %v928
      %v939 = vpack.c.b16 %v931, %v930
      %948 = vmatprep.subr.bf16.mxu0 0
      %949 = vmatpush1.bf16.msra.mxu0 %v939
      %950 = vmatprep.subr.bf16.mxu0 0
      %951 = vmatpush1.bf16.msra.mxu0 %v938
      %952 = vmatprep.subr.bf16.mxu0 0
      %953 = vmatpush1.bf16.msra.mxu0 %v937
      %954 = vmatprep.subr.bf16.mxu0 0
      %955 = vmatpush1.bf16.msra.mxu0 %v936
      %956 = vmatprep.subr.bf16.mxu0 0
      %957 = vmatpush1.bf16.msra.mxu0 %v935
      %958 = vmatprep.subr.bf16.mxu0 0
      %959 = vmatpush1.bf16.msra.mxu0 %v934
      %960 = vmatprep.subr.bf16.mxu0 0
      %961 = vmatpush1.bf16.msra.mxu0 %v933
      %962 = vmatprep.subr.bf16.mxu0 0
      %963 = vmatpush1.bf16.msra.mxu0 %v932
      %964 = vmatprep.subr.bf16.mxu0 0
      %965 = vmatpush2.bf16.msra.mxu0 0
      %966 = vmatprep.subr.bf16.mxu0 0
      %967 = vmatpush2.bf16.msra.mxu0 0
      %968 = vmatprep.subr.bf16.mxu0 0
      %969 = vmatpush2.bf16.msra.mxu0 0
      %970 = vmatprep.subr.bf16.mxu0 0
      %971 = vmatpush2.bf16.msra.mxu0 0
      %972 = vmatprep.subr.bf16.mxu0 0
      %973 = vmatpush2.bf16.msra.mxu0 0
      %974 = vmatprep.subr.bf16.mxu0 0
      %975 = vmatpush2.bf16.msra.mxu0 0
      %976 = vmatprep.subr.bf16.mxu0 0
      %977 = vmatpush2.bf16.msra.mxu0 0
      %978 = vmatprep.subr.bf16.mxu0 0
      %979 = vmatpush2.bf16.msra.mxu0 0
      %980 = vmatprep.mubr.bf16.mxu0 0
      %981 = vmatmul.mubr.bf16.gmra.mxu0 %v876
      %v982 = vpop.f32.mrf.mxu0
      %v983 = vadd.f32 %v898, %v982
      %v984 = vpop.f32.mrf.mxu0
      %v985 = vpop.f32.mrf.mxu0
      %v986 = vadd.f32 %v898, %v985
      %v987 = vpop.f32.mrf.mxu0
      %988 = vdwg.mxu0
      %v989 = vadd.f32 %v788, %v983
      %v990 = vadd.f32 %v789, %v986
      %s991 = scalar_lea.vmem [#allocation19], 2
      %v992 = vld [vmem:[%s991] sm:$0x1]
      %s993 = scalar_lea.vmem [#allocation19], 3
      %v994 = vld [vmem:[%s993] sm:$0x1]
      %v995 = vsel %vm269, %v989, 0.0
      %996 = vadd.xlane.f32.xlu0 %v995
      %v997 = vpop.xlane.xlu0 %996
      %v998 = vsel %vm269, %v990, 0.0
      %999 = vadd.xlane.f32.xlu0 %v998
      %v1000 = vpop.xlane.xlu0 %999
      %v1001 = vmul.f32 %v997, %v739
      %v1002 = vmul.f32 %v1000, %v739
      %v1003 = vsub.f32 %v989, %v1001
      %v1004 = vsub.f32 %v990, %v1002
      %v1005 = vmul.f32 %v1003, %v1003
      %v1006 = vmul.f32 %v1004, %v1004
      %v1007 = vsel %vm269, %v1005, 0.0
      %1008 = vadd.xlane.f32.xlu0 %v1007
      %v1009 = vpop.xlane.xlu0 %1008
      %v1010 = vsel %vm269, %v1006, 0.0
      %1011 = vadd.xlane.f32.xlu0 %v1010
      %v1012 = vpop.xlane.xlu0 %1011
      %v1013 = vmul.f32 %v1009, %v739
      %v1014 = vmul.f32 %v1012, %v739
      %v1015 = vadd.f32 %v1013, 1e-05
      %v1016 = vadd.f32 %v1014, 1e-05
      %v1017 = vrsqrt.pop %v1015
      %v1018 = vmul.f32 %v1015, %v1017
      %vm1019 = vcmp.eq.f32.partialorder %v1015, inf
      %v1020 = vsel %vm1019, %v1015, %v1018
      %vm1021 = vcmp.eq.f32.partialorder %v1015, 0.0
      %v1022 = vand.u32 %v1015, 2147483648
      %v1023 = vsel %vm1021, %v1022, %v1020
      %v1024 = vrsqrt.pop %v1016
      %v1025 = vmul.f32 %v1016, %v1024
      %vm1026 = vcmp.eq.f32.partialorder %v1016, inf
      %v1027 = vsel %vm1026, %v1016, %v1025
      %vm1028 = vcmp.eq.f32.partialorder %v1016, 0.0
      %v1029 = vand.u32 %v1016, 2147483648
      %v1030 = vsel %vm1028, %v1029, %v1027
      %v1031 = vrcp.pop %v1023
      %v1032 = vmul.f32 %v1003, %v1031
      %v1033 = vrcp.pop %v1030
      %v1034 = vmul.f32 %v1004, %v1033
      %v1036 = vlaneseq
      %v1037 = vshrl.u32 %v1036, 7
      %v1038 = vsub.s32 0, %v1037
      %v1039 = vrot.slane %v992, %v1038
      %v1041 = vmul.f32 %v1032, %v1039
      %v1042 = vmul.f32 %v1034, %v1039
      %v1044 = vlaneseq
      %v1045 = vshrl.u32 %v1044, 7
      %v1046 = vsub.s32 0, %v1045
      %v1047 = vrot.slane %v994, %v1046
      %v1049 = vadd.f32 %v1041, %v1047
      %v1050 = vadd.f32 %v1042, %v1047
      %v1051 = vpack.c.bf16 %v1050, %v1049
      %v1052 = vld [vmem:[#allocation21] sm:$0xf]
      %v1053 = vld [vmem:[#allocation21 + $0x4] sm:$0xf]
      %v1054 = vld [vmem:[#allocation21 + $0x8] sm:$0xf]
      %v1055 = vld [vmem:[#allocation21 + $0xc] sm:$0xf]
      %v1056 = vld [vmem:[#allocation22] sm:$0x1]
      %v1058 = vlaneseq
      %v1059 = vshrl.u32 %v1058, 7
      %v1060 = vsub.s32 0, %v1059
      %v1061 = vrot.slane %v1056, %v1060
      %v1067 = vunpack.c.l.b16 %v1052
      %v1068 = vunpack.c.l.b16 %v1053
      %v1069 = vunpack.c.l.b16 %v1054
      %v1070 = vunpack.c.l.b16 %v1055
      %v1071 = vpack.c.b16 %v1068, %v1067
      %v1072 = vpack.c.b16 %v1070, %v1069
      %v1076 = vsel %vm269, %v1051, 0
      %1078 = vmatprep.subr.bf16.mxu0 0
      %1079 = vmatpush1.bf16.msra.mxu0 0
      %1080 = vmatprep.subr.bf16.mxu0 0
      %1081 = vmatpush1.bf16.msra.mxu0 0
      %1082 = vmatprep.subr.bf16.mxu0 0
      %1083 = vmatpush1.bf16.msra.mxu0 0
      %1084 = vmatprep.subr.bf16.mxu0 0
      %1085 = vmatpush1.bf16.msra.mxu0 0
      %1086 = vmatprep.subr.bf16.mxu0 0
      %1087 = vmatpush1.bf16.msra.mxu0 0
      %1088 = vmatprep.subr.bf16.mxu0 0
      %1089 = vmatpush1.bf16.msra.mxu0 0
      %1090 = vmatprep.subr.bf16.mxu0 0
      %1091 = vmatpush1.bf16.msra.mxu0 %v1072
      %1092 = vmatprep.subr.bf16.mxu0 0
      %1093 = vmatpush1.bf16.msra.mxu0 %v1071
      %1094 = vmatprep.subr.bf16.mxu0 0
      %1095 = vmatpush2.bf16.msra.mxu0 0
      %1096 = vmatprep.subr.bf16.mxu0 0
      %1097 = vmatpush2.bf16.msra.mxu0 0
      %1098 = vmatprep.subr.bf16.mxu0 0
      %1099 = vmatpush2.bf16.msra.mxu0 0
      %1100 = vmatprep.subr.bf16.mxu0 0
      %1101 = vmatpush2.bf16.msra.mxu0 0
      %1102 = vmatprep.subr.bf16.mxu0 0
      %1103 = vmatpush2.bf16.msra.mxu0 0
      %1104 = vmatprep.subr.bf16.mxu0 0
      %1105 = vmatpush2.bf16.msra.mxu0 0
      %1106 = vmatprep.subr.bf16.mxu0 0
      %1107 = vmatpush2.bf16.msra.mxu0 0
      %1108 = vmatprep.subr.bf16.mxu0 0
      %1109 = vmatpush2.bf16.msra.mxu0 0
      %1110 = vmatprep.mubr.bf16.mxu0 0
      %1111 = vmatmul.mubr.bf16.gmra.mxu0 %v1076
      %v1112 = vpop.f32.mrf.mxu0
      %v1113 = vadd.f32 %v1061, %v1112
      %v1114 = vpop.f32.mrf.mxu0
      %v1115 = vpop.f32.mrf.mxu0
      %v1116 = vadd.f32 %v1061, %v1115
      %v1117 = vpop.f32.mrf.mxu0
      %1118 = vdwg.mxu0
      %v1119 = vmul.f32 %v1113, 0.5
      %v1120 = vmul.f32 %v1116, 0.5
      %v1121 = vmul.f32 %v1113, 0.044715
      %v1122 = vmul.f32 %v1116, 0.044715
      %v1123 = vmul.f32 %v1121, %v1113
      %v1124 = vmul.f32 %v1122, %v1116
      %v1125 = vmul.f32 %v1123, %v1113
      %v1126 = vmul.f32 %v1124, %v1116
      %v1127 = vadd.f32 %v1113, %v1125
      %v1128 = vadd.f32 %v1116, %v1126
      %v1129 = vmul.f32 %v1127, 0.7978846
      %v1130 = vmul.f32 %v1128, 0.7978846
      %v1131 = vtanh.pop %v1129
      %v1132 = vtanh.pop %v1130
      %v1133 = vadd.f32 %v1131, 1.0
      %v1134 = vadd.f32 %v1132, 1.0
      %v1135 = vmul.f32 %v1119, %v1133
      %v1136 = vmul.f32 %v1120, %v1134
      %s1137 = scalar_lea.vmem [#allocation19], 4
      %v1138 = vld [vmem:[%s1137] sm:$0x1]
      %s1139 = scalar_lea.vmem [#allocation19], 5
      %v1140 = vld [vmem:[%s1139] sm:$0x1]
      %v1141 = vsel %vm269, %v1135, 0.0
      %1142 = vadd.xlane.f32.xlu0 %v1141
      %v1143 = vpop.xlane.xlu0 %1142
      %v1144 = vsel %vm269, %v1136, 0.0
      %1145 = vadd.xlane.f32.xlu0 %v1144
      %v1146 = vpop.xlane.xlu0 %1145
      %v1147 = vmul.f32 %v1143, %v739
      %v1148 = vmul.f32 %v1146, %v739
      %v1149 = vsub.f32 %v1135, %v1147
      %v1150 = vsub.f32 %v1136, %v1148
      %v1151 = vmul.f32 %v1149, %v1149
      %v1152 = vmul.f32 %v1150, %v1150
      %v1153 = vsel %vm269, %v1151, 0.0
      %1154 = vadd.xlane.f32.xlu0 %v1153
      %v1155 = vpop.xlane.xlu0 %1154
      %v1156 = vsel %vm269, %v1152, 0.0
      %1157 = vadd.xlane.f32.xlu0 %v1156
      %v1158 = vpop.xlane.xlu0 %1157
      %v1159 = vmul.f32 %v1155, %v739
      %v1160 = vmul.f32 %v1158, %v739
      %v1161 = vadd.f32 %v1159, 1e-05
      %v1162 = vadd.f32 %v1160, 1e-05
      %v1163 = vrsqrt.pop %v1161
      %v1164 = vmul.f32 %v1161, %v1163
      %vm1165 = vcmp.eq.f32.partialorder %v1161, inf
      %v1166 = vsel %vm1165, %v1161, %v1164
      %vm1167 = vcmp.eq.f32.partialorder %v1161, 0.0
      %v1168 = vand.u32 %v1161, 2147483648
      %v1169 = vsel %vm1167, %v1168, %v1166
      %v1170 = vrsqrt.pop %v1162
      %v1171 = vmul.f32 %v1162, %v1170
      %vm1172 = vcmp.eq.f32.partialorder %v1162, inf
      %v1173 = vsel %vm1172, %v1162, %v1171
      %vm1174 = vcmp.eq.f32.partialorder %v1162, 0.0
      %v1175 = vand.u32 %v1162, 2147483648
      %v1176 = vsel %vm1174, %v1175, %v1173
      %v1177 = vrcp.pop %v1169
      %v1178 = vmul.f32 %v1149, %v1177
      %v1179 = vrcp.pop %v1176
      %v1180 = vmul.f32 %v1150, %v1179
      %v1182 = vlaneseq
      %v1183 = vshrl.u32 %v1182, 7
      %v1184 = vsub.s32 0, %v1183
      %v1185 = vrot.slane %v1138, %v1184
      %v1187 = vmul.f32 %v1178, %v1185
      %v1188 = vmul.f32 %v1180, %v1185
      %v1190 = vlaneseq
      %v1191 = vshrl.u32 %v1190, 7
      %v1192 = vsub.s32 0, %v1191
      %v1193 = vrot.slane %v1140, %v1192
      %v1195 = vadd.f32 %v1187, %v1193
      %v1196 = vadd.f32 %v1188, %v1193
      %v1197 = vsel %vm269, %v1195, 0.0
      %v1198 = vrot.slane %v1197, 4
      %v1199 = vadd.f32 %v1197, %v1198
      %v1200 = vrot.slane %v1199, 2
      %v1201 = vadd.f32 %v1199, %v1200
      %v1202 = vrot.slane %v1201, 1
      %v1203 = vadd.f32 %v1201, %v1202
      %v1204 = vsel %vm269, %v1196, 0.0
      %v1205 = vrot.slane %v1204, 4
      %v1206 = vadd.f32 %v1204, %v1205
      %v1207 = vrot.slane %v1206, 2
      %v1208 = vadd.f32 %v1206, %v1207
      %v1209 = vrot.slane %v1208, 1
      %v1210 = vadd.f32 %v1208, %v1209
      %v1211 = vrcp.pop 8.0
      %v1212 = vmul.f32 %v1203, %v1211
      %v1213 = vmul.f32 %v1210, %v1211
      %v1214 = vpack.c.bf16 %v1212, %v1212
      %v1215 = vpack.c.bf16 %v1213, %v1213
      %v1219 = vunpack.c.l.s4 1966171168
      %v1220 = vunpack.c.0.s8 %v1219
      %v1221 = vlaneseq
      %v1222 = vshrl.u32 %v1221, 7
      %v1223 = vsub.s32 %v1220, %v1222
      %v1224 = vrot.slane %v1214, %v1223
      %v1226 = vunpack.c.l.s4 1966171168
      %v1227 = vunpack.c.0.s8 %v1226
      %v1228 = vlaneseq
      %v1229 = vshrl.u32 %v1228, 7
      %v1230 = vsub.s32 %v1227, %v1229
      %v1231 = vrot.slane %v1224, %v1230
      %v1233 = vunpack.c.l.s4 1966171168
      %v1234 = vunpack.c.0.s8 %v1233
      %v1235 = vlaneseq
      %v1236 = vshrl.u32 %v1235, 7
      %v1237 = vsub.s32 %v1234, %v1236
      %v1238 = vrot.slane %v1215, %v1237
      %v1240 = vunpack.c.l.s4 1966171168
      %v1241 = vunpack.c.0.s8 %v1240
      %v1242 = vlaneseq
      %v1243 = vshrl.u32 %v1242, 7
      %v1244 = vsub.s32 %v1241, %v1243
      %v1245 = vrot.slane %v1238, %v1244
      %v1247 = vunpack.c.l.s4 1935823168
      %v1248 = vunpack.c.0.s8 %v1247
      %v1249 = vlaneseq
      %v1250 = vshrl.u32 %v1249, 7
      %v1251 = vsub.s32 %v1248, %v1250
      %v1252 = vrot.slane %v1231, %v1251
      %v1254 = vunpack.c.l.s4 1935823168
      %v1255 = vunpack.c.0.s8 %v1254
      %v1256 = vlaneseq
      %v1257 = vshrl.u32 %v1256, 7
      %v1258 = vsub.s32 %v1255, %v1257
      %v1259 = vrot.slane %v1252, %v1258
      %v1261 = vunpack.c.l.s4 1935823168
      %v1262 = vunpack.c.0.s8 %v1261
      %v1263 = vlaneseq
      %v1264 = vshrl.u32 %v1263, 7
      %v1265 = vsub.s32 %v1262, %v1264
      %v1266 = vrot.slane %v1245, %v1265
      %v1268 = vunpack.c.l.s4 1935823168
      %v1269 = vunpack.c.0.s8 %v1268
      %v1270 = vlaneseq
      %v1271 = vshrl.u32 %v1270, 7
      %v1272 = vsub.s32 %v1269, %v1271
      %v1273 = vrot.slane %v1266, %v1272
      %v1274 = vunpack.c.l.b16 %v1259
      %v1275 = vunpack.c.l.b16 %v1273
      %v1276 = vrot.slane %v1275, 7
      %vm1277 = vcmask 1041409
      %v1278 = vsel %vm1277, %v1276, %v1274
      %v1279 = vpack.c.b16 %v1278, %v1278
      %v1281 = vunpack.c.l.s4 1966171168
      %v1282 = vunpack.c.0.s8 %v1281
      %v1283 = vlaneseq
      %v1284 = vshrl.u32 %v1283, 7
      %v1285 = vsub.s32 %v1282, %v1284
      %v1286 = vrot.slane %v1279, %v1285
      %v1288 = vunpack.c.l.s4 1966171168
      %v1289 = vunpack.c.0.s8 %v1288
      %v1290 = vlaneseq
      %v1291 = vshrl.u32 %v1290, 7
      %v1292 = vsub.s32 %v1289, %v1291
      %v1293 = vrot.slane %v1286, %v1292
      %vm1295 = vcmask 253952
      %1296 = vst.msk [vmem:[#allocation2] sm:$0x1] %vm1295, %v1293
      %1297 = vst [vmem:[#allocation3] sm:$0xff] 0.0
    $region137: #{inversion_plm_mlc_forward.1} parent=1 // pred_fallthru
      _
    %v1298 = vld [vmem:[#allocation2] sm:$0x1]
    %v1299 = vld [vmem:[%s17] sm:$0xff]
    %v1300 = vld [vmem:[%s17 + $0x8] sm:$0xff]
    %v1301 = vld [vmem:[%s17 + $0x10] sm:$0xff]
    %v1302 = vld [vmem:[%s17 + $0x18] sm:$0xff]
    %v1303 = vld [vmem:[%s17 + $0x20] sm:$0xff]
    %v1304 = vld [vmem:[%s17 + $0x28] sm:$0xff]
    %v1305 = vld [vmem:[%s17 + $0x30] sm:$0xff]
    %v1306 = vld [vmem:[%s17 + $0x38] sm:$0xff]
    %v1307 = vld [vmem:[#allocation25] sm:$0xf]
    %v1309 = vlaneseq
    %v1310 = vshrl.u32 %v1309, 7
    %v1311 = vsub.s32 0, %v1310
    %v1312 = vrot.slane %v1307, %v1311
    %v1313 = vlaneseq
    %v1314 = vshrl.u32 %v1313, 7
    %v1315 = vsub.s32 1, %v1314
    %v1316 = vrot.slane %v1307, %v1315
    %v1317 = vlaneseq
    %v1318 = vshrl.u32 %v1317, 7
    %v1319 = vsub.s32 2, %v1318
    %v1320 = vrot.slane %v1307, %v1319
    %v1321 = vlaneseq
    %v1322 = vshrl.u32 %v1321, 7
    %v1323 = vsub.s32 3, %v1322
    %v1324 = vrot.slane %v1307, %v1323
    %v1337 = vunpack.c.l.b16 %v1299
    %v1338 = vunpack.c.h.b16 %v1299
    %v1339 = vunpack.c.l.b16 %v1300
    %v1340 = vunpack.c.h.b16 %v1300
    %v1341 = vunpack.c.l.b16 %v1301
    %v1342 = vunpack.c.h.b16 %v1301
    %v1343 = vunpack.c.l.b16 %v1302
    %v1344 = vunpack.c.h.b16 %v1302
    %v1345 = vunpack.c.l.b16 %v1303
    %v1346 = vunpack.c.h.b16 %v1303
    %v1347 = vunpack.c.l.b16 %v1304
    %v1348 = vunpack.c.h.b16 %v1304
    %v1349 = vunpack.c.l.b16 %v1305
    %v1350 = vunpack.c.h.b16 %v1305
    %v1351 = vunpack.c.l.b16 %v1306
    %v1352 = vunpack.c.h.b16 %v1306
    %v1353 = vpack.c.b16 %v1341, %v1337
    %v1354 = vpack.c.b16 %v1342, %v1338
    %v1355 = vpack.c.b16 %v1343, %v1339
    %v1356 = vpack.c.b16 %v1344, %v1340
    %v1357 = vpack.c.b16 %v1349, %v1345
    %v1358 = vpack.c.b16 %v1350, %v1346
    %v1359 = vpack.c.b16 %v1351, %v1347
    %v1360 = vpack.c.b16 %v1352, %v1348
    %vm1369 = vcmask 261120
    %v1371 = vsel %vm1369, %v1298, 0
    %1373 = vmatprep.subr.bf16.mxu0 0
    %1374 = vmatpush1.bf16.msra.mxu0 0
    %1375 = vmatprep.subr.bf16.mxu0 0
    %1376 = vmatpush1.bf16.msra.mxu0 0
    %1377 = vmatprep.subr.bf16.mxu0 0
    %1378 = vmatpush1.bf16.msra.mxu0 0
    %1379 = vmatprep.subr.bf16.mxu0 0
    %1380 = vmatpush1.bf16.msra.mxu0 0
    %1381 = vmatprep.subr.bf16.mxu0 0
    %1382 = vmatpush1.bf16.msra.mxu0 0
    %1383 = vmatprep.subr.bf16.mxu0 0
    %1384 = vmatpush1.bf16.msra.mxu0 0
    %1385 = vmatprep.subr.bf16.mxu0 %v1358
    %1386 = vmatpush1.bf16.msra.mxu0 %v1357
    %1387 = vmatprep.subr.bf16.mxu0 %v1354
    %1388 = vmatpush1.bf16.msra.mxu0 %v1353
    %1389 = vmatprep.subr.bf16.mxu0 0
    %1390 = vmatpush2.bf16.msra.mxu0 0
    %1391 = vmatprep.subr.bf16.mxu0 0
    %1392 = vmatpush2.bf16.msra.mxu0 0
    %1393 = vmatprep.subr.bf16.mxu0 0
    %1394 = vmatpush2.bf16.msra.mxu0 0
    %1395 = vmatprep.subr.bf16.mxu0 0
    %1396 = vmatpush2.bf16.msra.mxu0 0
    %1397 = vmatprep.subr.bf16.mxu0 0
    %1398 = vmatpush2.bf16.msra.mxu0 0
    %1399 = vmatprep.subr.bf16.mxu0 0
    %1400 = vmatpush2.bf16.msra.mxu0 0
    %1401 = vmatprep.subr.bf16.mxu0 0
    %1402 = vmatpush2.bf16.msra.mxu0 0
    %1403 = vmatprep.subr.bf16.mxu0 0
    %1404 = vmatpush2.bf16.msra.mxu0 0
    %1405 = vmatprep.mubr.bf16.mxu0 0
    %1406 = vmatmul.mubr.bf16.gmra.mxu0 %v1371
    %v1407 = vpop.f32.mrf.mxu0
    %v1408 = vadd.f32 %v1312, %v1407
    %v1409 = vpop.f32.mrf.mxu0
    %v1410 = vadd.f32 %v1316, %v1409
    %v1411 = vpop.f32.mrf.mxu0
    %v1412 = vpop.f32.mrf.mxu0
    %1413 = vdwg.mxu0
    %1414 = vmatprep.subr.bf16.mxu0 0
    %1415 = vmatpush1.bf16.msra.mxu0 0
    %1416 = vmatprep.subr.bf16.mxu0 0
    %1417 = vmatpush1.bf16.msra.mxu0 0
    %1418 = vmatprep.subr.bf16.mxu0 0
    %1419 = vmatpush1.bf16.msra.mxu0 0
    %1420 = vmatprep.subr.bf16.mxu0 0
    %1421 = vmatpush1.bf16.msra.mxu0 0
    %1422 = vmatprep.subr.bf16.mxu0 0
    %1423 = vmatpush1.bf16.msra.mxu0 0
    %1424 = vmatprep.subr.bf16.mxu0 0
    %1425 = vmatpush1.bf16.msra.mxu0 0
    %1426 = vmatprep.subr.bf16.mxu0 %v1360
    %1427 = vmatpush1.bf16.msra.mxu0 %v1359
    %1428 = vmatprep.subr.bf16.mxu0 %v1356
    %1429 = vmatpush1.bf16.msra.mxu0 %v1355
    %1430 = vmatprep.subr.bf16.mxu0 0
    %1431 = vmatpush2.bf16.msra.mxu0 0
    %1432 = vmatprep.subr.bf16.mxu0 0
    %1433 = vmatpush2.bf16.msra.mxu0 0
    %1434 = vmatprep.subr.bf16.mxu0 0
    %1435 = vmatpush2.bf16.msra.mxu0 0
    %1436 = vmatprep.subr.bf16.mxu0 0
    %1437 = vmatpush2.bf16.msra.mxu0 0
    %1438 = vmatprep.subr.bf16.mxu0 0
    %1439 = vmatpush2.bf16.msra.mxu0 0
    %1440 = vmatprep.subr.bf16.mxu0 0
    %1441 = vmatpush2.bf16.msra.mxu0 0
    %1442 = vmatprep.subr.bf16.mxu0 0
    %1443 = vmatpush2.bf16.msra.mxu0 0
    %1444 = vmatprep.subr.bf16.mxu0 0
    %1445 = vmatpush2.bf16.msra.mxu0 0
    %1446 = vmatprep.mubr.bf16.mxu0 0
    %1447 = vmatmul.mubr.bf16.gmra.mxu0 %v1371
    %v1448 = vpop.f32.mrf.mxu0
    %v1449 = vadd.f32 %v1320, %v1448
    %v1450 = vpop.f32.mrf.mxu0
    %v1451 = vadd.f32 %v1324, %v1450
    %v1452 = vpop.f32.mrf.mxu0
    %v1453 = vpop.f32.mrf.mxu0
    %1454 = vdwg.mxu0
    %v1455 = vxor.u32 %v1408, 2147483648
    %v1456 = vxor.u32 %v1410, 2147483648
    %v1457 = vxor.u32 %v1449, 2147483648
    %v1458 = vxor.u32 %v1451, 2147483648
    %v1459 = vmul.f32 %v1455, 1.442695
    %v1460 = vpow.pop %v1459
    %v1461 = vmul.f32 %v1456, 1.442695
    %v1462 = vpow.pop %v1461
    %v1463 = vmul.f32 %v1457, 1.442695
    %v1464 = vpow.pop %v1463
    %v1465 = vmul.f32 %v1458, 1.442695
    %v1466 = vpow.pop %v1465
    %v1467 = vadd.f32 %v1460, 1.0
    %v1468 = vadd.f32 %v1462, 1.0
    %v1469 = vadd.f32 %v1464, 1.0
    %v1470 = vadd.f32 %v1466, 1.0
    %v1471 = vrcp.pop %v1467
    %v1472 = vmul.f32 1.0, %v1471
    %v1473 = vrcp.pop %v1468
    %v1474 = vmul.f32 1.0, %v1473
    %v1475 = vrcp.pop %v1469
    %v1476 = vmul.f32 1.0, %v1475
    %v1477 = vrcp.pop %v1470
    %v1478 = vmul.f32 1.0, %v1477
    %v1483 = vcombine.low %v1472, %v1474
    %v1484 = vcombine.low %v1476, %v1478
    %v1486 = vunpack.c.l.s4 1983009808
    %v1487 = vunpack.c.0.s8 %v1486
    %v1488 = vlaneseq
    %v1489 = vshrl.u32 %v1488, 7
    %v1490 = vsub.s32 %v1487, %v1489
    %v1491 = vrot.slane %v1483, %v1490
    %v1493 = vunpack.c.l.s4 1983009808
    %v1494 = vunpack.c.0.s8 %v1493
    %v1495 = vlaneseq
    %v1496 = vshrl.u32 %v1495, 7
    %v1497 = vsub.s32 %v1494, %v1496
    %v1498 = vrot.slane %v1484, %v1497
    %v1499 = vcombine.low %v1491, %v1498
    %1501 = vst [vmem:[#allocation27] sm:$0xff] %v1499
    %v1502 = vld [vmem:[#allocation24] sm:$0x3]
    %s1503 = smul.u32 0, 512
    %v1504 = vlaneseq
    %v1505 = vand.u32 %v1504, 127
    %v1506 = vadd.s32 %v1505, 128
    %v1507 = vadd.s32 %v1505, 256
    %v1508 = vadd.s32 %v1505, 384
    %v1509 = vstv %s1503
    %v1510 = vadd.s32 %v1509, %v1505
    %v1511 = vadd.s32 %v1509, %v1506
    %v1512 = vadd.s32 %v1509, %v1507
    %v1513 = vadd.s32 %v1509, %v1508
    %1514 = vset.pattern.permute.xlu0 0
    %1515 = vperm.xlu0 %1514, %v1502
    %v1516 = vpop.permute.xlu0 %1515
    %vm1517 = vcmp.eq.s32.totalorder %v1510, %v1516
    %vm1518 = vcmp.eq.s32.totalorder %v1511, %v1516
    %vm1519 = vcmp.eq.s32.totalorder %v1512, %v1516
    %vm1520 = vcmp.eq.s32.totalorder %v1513, %v1516
    %v1521 = vsel %vm1517, 1, 0
    %v1522 = vsel %vm1518, 1, 0
    %v1523 = vsel %vm1519, 1, 0
    %v1524 = vsel %vm1520, 1, 0
    %v1525 = vcvt.s32.f32 %v1521
    %v1526 = vcvt.s32.f32 %v1522
    %v1527 = vcvt.s32.f32 %v1523
    %v1528 = vcvt.s32.f32 %v1524
    %v1529 = vmax.f32 %v1525, 0.0
    %v1530 = vmax.f32 %v1526, 0.0
    %v1531 = vmax.f32 %v1527, 0.0
    %v1532 = vmax.f32 %v1528, 0.0
    %1533 = vset.pattern.permute.xlu0 1
    %1534 = vperm.xlu0 %1533, %v1502
    %v1535 = vpop.permute.xlu0 %1534
    %vm1536 = vcmp.eq.s32.totalorder %v1510, %v1535
    %vm1537 = vcmp.eq.s32.totalorder %v1511, %v1535
    %vm1538 = vcmp.eq.s32.totalorder %v1512, %v1535
    %vm1539 = vcmp.eq.s32.totalorder %v1513, %v1535
    %v1540 = vsel %vm1536, 1, 0
    %v1541 = vsel %vm1537, 1, 0
    %v1542 = vsel %vm1538, 1, 0
    %v1543 = vsel %vm1539, 1, 0
    %v1544 = vcvt.s32.f32 %v1540
    %v1545 = vcvt.s32.f32 %v1541
    %v1546 = vcvt.s32.f32 %v1542
    %v1547 = vcvt.s32.f32 %v1543
    %v1548 = vmax.f32 %v1529, %v1544
    %v1549 = vmax.f32 %v1530, %v1545
    %v1550 = vmax.f32 %v1531, %v1546
    %v1551 = vmax.f32 %v1532, %v1547
    %1552 = vset.pattern.permute.xlu0 2
    %1553 = vperm.xlu0 %1552, %v1502
    %v1554 = vpop.permute.xlu0 %1553
    %vm1555 = vcmp.eq.s32.totalorder %v1510, %v1554
    %vm1556 = vcmp.eq.s32.totalorder %v1511, %v1554
    %vm1557 = vcmp.eq.s32.totalorder %v1512, %v1554
    %vm1558 = vcmp.eq.s32.totalorder %v1513, %v1554
    %v1559 = vsel %vm1555, 1, 0
    %v1560 = vsel %vm1556, 1, 0
    %v1561 = vsel %vm1557, 1, 0
    %v1562 = vsel %vm1558, 1, 0
    %v1563 = vcvt.s32.f32 %v1559
    %v1564 = vcvt.s32.f32 %v1560
    %v1565 = vcvt.s32.f32 %v1561
    %v1566 = vcvt.s32.f32 %v1562
    %v1567 = vmax.f32 %v1548, %v1563
    %v1568 = vmax.f32 %v1549, %v1564
    %v1569 = vmax.f32 %v1550, %v1565
    %v1570 = vmax.f32 %v1551, %v1566
    %1571 = vset.pattern.permute.xlu0 3
    %1572 = vperm.xlu0 %1571, %v1502
    %v1573 = vpop.permute.xlu0 %1572
    %vm1574 = vcmp.eq.s32.totalorder %v1510, %v1573
    %vm1575 = vcmp.eq.s32.totalorder %v1511, %v1573
    %vm1576 = vcmp.eq.s32.totalorder %v1512, %v1573
    %vm1577 = vcmp.eq.s32.totalorder %v1513, %v1573
    %v1578 = vsel %vm1574, 1, 0
    %v1579 = vsel %vm1575, 1, 0
    %v1580 = vsel %vm1576, 1, 0
    %v1581 = vsel %vm1577, 1, 0
    %v1582 = vcvt.s32.f32 %v1578
    %v1583 = vcvt.s32.f32 %v1579
    %v1584 = vcvt.s32.f32 %v1580
    %v1585 = vcvt.s32.f32 %v1581
    %v1586 = vmax.f32 %v1567, %v1582
    %v1587 = vmax.f32 %v1568, %v1583
    %v1588 = vmax.f32 %v1569, %v1584
    %v1589 = vmax.f32 %v1570, %v1585
    %1590 = vset.pattern.permute.xlu0 4
    %1591 = vperm.xlu0 %1590, %v1502
    %v1592 = vpop.permute.xlu0 %1591
    %vm1593 = vcmp.eq.s32.totalorder %v1510, %v1592
    %vm1594 = vcmp.eq.s32.totalorder %v1511, %v1592
    %vm1595 = vcmp.eq.s32.totalorder %v1512, %v1592
    %vm1596 = vcmp.eq.s32.totalorder %v1513, %v1592
    %v1597 = vsel %vm1593, 1, 0
    %v1598 = vsel %vm1594, 1, 0
    %v1599 = vsel %vm1595, 1, 0
    %v1600 = vsel %vm1596, 1, 0
    %v1601 = vcvt.s32.f32 %v1597
    %v1602 = vcvt.s32.f32 %v1598
    %v1603 = vcvt.s32.f32 %v1599
    %v1604 = vcvt.s32.f32 %v1600
    %v1605 = vmax.f32 %v1586, %v1601
    %v1606 = vmax.f32 %v1587, %v1602
    %v1607 = vmax.f32 %v1588, %v1603
    %v1608 = vmax.f32 %v1589, %v1604
    %1609 = vset.pattern.permute.xlu0 5
    %1610 = vperm.xlu0 %1609, %v1502
    %v1611 = vpop.permute.xlu0 %1610
    %vm1612 = vcmp.eq.s32.totalorder %v1510, %v1611
    %vm1613 = vcmp.eq.s32.totalorder %v1511, %v1611
    %vm1614 = vcmp.eq.s32.totalorder %v1512, %v1611
    %vm1615 = vcmp.eq.s32.totalorder %v1513, %v1611
    %v1616 = vsel %vm1612, 1, 0
    %v1617 = vsel %vm1613, 1, 0
    %v1618 = vsel %vm1614, 1, 0
    %v1619 = vsel %vm1615, 1, 0
    %v1620 = vcvt.s32.f32 %v1616
    %v1621 = vcvt.s32.f32 %v1617
    %v1622 = vcvt.s32.f32 %v1618
    %v1623 = vcvt.s32.f32 %v1619
    %v1624 = vmax.f32 %v1605, %v1620
    %v1625 = vmax.f32 %v1606, %v1621
    %v1626 = vmax.f32 %v1607, %v1622
    %v1627 = vmax.f32 %v1608, %v1623
    %1628 = vset.pattern.permute.xlu0 6
    %1629 = vperm.xlu0 %1628, %v1502
    %v1630 = vpop.permute.xlu0 %1629
    %vm1631 = vcmp.eq.s32.totalorder %v1510, %v1630
    %vm1632 = vcmp.eq.s32.totalorder %v1511, %v1630
    %vm1633 = vcmp.eq.s32.totalorder %v1512, %v1630
    %vm1634 = vcmp.eq.s32.totalorder %v1513, %v1630
    %v1635 = vsel %vm1631, 1, 0
    %v1636 = vsel %vm1632, 1, 0
    %v1637 = vsel %vm1633, 1, 0
    %v1638 = vsel %vm1634, 1, 0
    %v1639 = vcvt.s32.f32 %v1635
    %v1640 = vcvt.s32.f32 %v1636
    %v1641 = vcvt.s32.f32 %v1637
    %v1642 = vcvt.s32.f32 %v1638
    %v1643 = vmax.f32 %v1624, %v1639
    %v1644 = vmax.f32 %v1625, %v1640
    %v1645 = vmax.f32 %v1626, %v1641
    %v1646 = vmax.f32 %v1627, %v1642
    %1647 = vset.pattern.permute.xlu0 7
    %1648 = vperm.xlu0 %1647, %v1502
    %v1649 = vpop.permute.xlu0 %1648
    %vm1650 = vcmp.eq.s32.totalorder %v1510, %v1649
    %vm1651 = vcmp.eq.s32.totalorder %v1511, %v1649
    %vm1652 = vcmp.eq.s32.totalorder %v1512, %v1649
    %vm1653 = vcmp.eq.s32.totalorder %v1513, %v1649
    %v1654 = vsel %vm1650, 1, 0
    %v1655 = vsel %vm1651, 1, 0
    %v1656 = vsel %vm1652, 1, 0
    %v1657 = vsel %vm1653, 1, 0
    %v1658 = vcvt.s32.f32 %v1654
    %v1659 = vcvt.s32.f32 %v1655
    %v1660 = vcvt.s32.f32 %v1656
    %v1661 = vcvt.s32.f32 %v1657
    %v1662 = vmax.f32 %v1643, %v1658
    %v1663 = vmax.f32 %v1644, %v1659
    %v1664 = vmax.f32 %v1645, %v1660
    %v1665 = vmax.f32 %v1646, %v1661
    %vm1666 = vcmp.lt.s32.totalorder %v1510, 3
    %vm1667 = vcmp.lt.s32.totalorder %v1511, 3
    %vm1668 = vcmp.lt.s32.totalorder %v1512, 3
    %vm1669 = vcmp.lt.s32.totalorder %v1513, 3
    %v1670 = vsel %vm1666, 0.0, %v1662
    %v1671 = vsel %vm1667, 0.0, %v1663
    %v1672 = vsel %vm1668, 0.0, %v1664
    %v1673 = vsel %vm1669, 0.0, %v1665
    %v1674 = vlog2.pop %v1472
    %v1675 = vmul.f32 %v1674, 0.6931472
    %v1676 = vlog2.pop %v1474
    %v1677 = vmul.f32 %v1676, 0.6931472
    %v1678 = vlog2.pop %v1476
    %v1679 = vmul.f32 %v1678, 0.6931472
    %v1680 = vlog2.pop %v1478
    %v1681 = vmul.f32 %v1680, 0.6931472
    %v1682 = vmax.f32 %v1675, -100.0
    %v1683 = vmax.f32 %v1677, -100.0
    %v1684 = vmax.f32 %v1679, -100.0
    %v1685 = vmax.f32 %v1681, -100.0
    %v1686 = vsub.f32 1.0, %v1472
    %v1687 = vsub.f32 1.0, %v1474
    %v1688 = vsub.f32 1.0, %v1476
    %v1689 = vsub.f32 1.0, %v1478
    %v1690 = vlog2.pop %v1686
    %v1691 = vmul.f32 %v1690, 0.6931472
    %v1692 = vlog2.pop %v1687
    %v1693 = vmul.f32 %v1692, 0.6931472
    %v1694 = vlog2.pop %v1688
    %v1695 = vmul.f32 %v1694, 0.6931472
    %v1696 = vlog2.pop %v1689
    %v1697 = vmul.f32 %v1696, 0.6931472
    %v1698 = vmax.f32 %v1691, -100.0
    %v1699 = vmax.f32 %v1693, -100.0
    %v1700 = vmax.f32 %v1695, -100.0
    %v1701 = vmax.f32 %v1697, -100.0
    %v1702 = vld [vmem:[#allocation3] sm:$0xff]
    %v1703 = vmul.f32 %v1670, %v1682
    %v1704 = vmul.f32 %v1671, %v1683
    %v1705 = vmul.f32 %v1672, %v1684
    %v1706 = vmul.f32 %v1673, %v1685
    %v1707 = vsub.f32 1.0, %v1670
    %v1708 = vsub.f32 1.0, %v1671
    %v1709 = vsub.f32 1.0, %v1672
    %v1710 = vsub.f32 1.0, %v1673
    %v1711 = vmul.f32 %v1707, %v1698
    %v1712 = vmul.f32 %v1708, %v1699
    %v1713 = vmul.f32 %v1709, %v1700
    %v1714 = vmul.f32 %v1710, %v1701
    %v1715 = vadd.f32 %v1703, %v1711
    %v1716 = vadd.f32 %v1704, %v1712
    %v1717 = vadd.f32 %v1705, %v1713
    %v1718 = vadd.f32 %v1706, %v1714
    %v1719 = vsub.f32 0.0, %v1715
    %v1720 = vsub.f32 0.0, %v1716
    %v1721 = vsub.f32 0.0, %v1717
    %v1722 = vsub.f32 0.0, %v1718
    %v1727 = vcombine.low %v1719, %v1720
    %v1728 = vcombine.low %v1721, %v1722
    %v1730 = vunpack.c.l.s4 1983009808
    %v1731 = vunpack.c.0.s8 %v1730
    %v1732 = vlaneseq
    %v1733 = vshrl.u32 %v1732, 7
    %v1734 = vsub.s32 %v1731, %v1733
    %v1735 = vrot.slane %v1727, %v1734
    %v1737 = vunpack.c.l.s4 1983009808
    %v1738 = vunpack.c.0.s8 %v1737
    %v1739 = vlaneseq
    %v1740 = vshrl.u32 %v1739, 7
    %v1741 = vsub.s32 %v1738, %v1740
    %v1742 = vrot.slane %v1728, %v1741
    %v1743 = vcombine.low %v1735, %v1742
    %v1745 = vadd.f32 %v1702, %v1743
    %1746 = vst [vmem:[#allocation3] sm:$0xff] %v1745
    // Predicated region
    $region138: #{inversion_plm_mlc_forward.1} parent=1 // pred_check
      %p1747 = pneg %p239
    $region139: #{inversion_plm_mlc_forward.1} parent=1 // pred_check_branch
      %1749 = sbr.rel (%p1747) target = $region141
    $region140: #{inversion_plm_mlc_forward.1} parent=1 // pred_region
      %v1750 = vld [vmem:[#allocation3] sm:$0xff]
      %v1752 = vcombine.high %v1750, %v1750
      %v1754 = vunpack.c.l.s4 1983009808
      %v1755 = vunpack.c.0.s8 %v1754
      %v1756 = vlaneseq
      %v1757 = vshrl.u32 %v1756, 7
      %v1758 = vsub.s32 %v1755, %v1757
      %v1759 = vrot.slane %v1750, %v1758
      %v1761 = vunpack.c.l.s4 1983009808
      %v1762 = vunpack.c.0.s8 %v1761
      %v1763 = vlaneseq
      %v1764 = vshrl.u32 %v1763, 7
      %v1765 = vsub.s32 %v1762, %v1764
      %v1766 = vrot.slane %v1752, %v1765
      %v1767 = vcombine.high %v1759, %v1759
      %v1768 = vcombine.high %v1766, %v1766
      %vm1773 = vcmask 1041408
      %v1774 = vsel %vm1773, %v1759, 0.0
      %v1775 = vsel %vm1773, %v1767, 0.0
      %v1776 = vadd.f32 %v1774, %v1775
      %v1777 = vsel %vm1773, %v1766, 0.0
      %v1778 = vadd.f32 %v1776, %v1777
      %v1779 = vsel %vm1773, %v1768, 0.0
      %v1780 = vadd.f32 %v1778, %v1779
      %1781 = vadd.xlane.f32.xlu0 %v1780
      %v1782 = vpop.xlane.xlu0 %1781
      %v1783 = vrot.slane %v1782, 4
      %v1784 = vadd.f32 %v1782, %v1783
      %v1785 = vrot.slane %v1784, 2
      %v1786 = vadd.f32 %v1784, %v1785
      %v1787 = vrot.slane %v1786, 1
      %v1788 = vadd.f32 %v1786, %v1787
      %s1789 = vtos %v1788
      %v1790 = vstv %s1789
      %v1791 = vrcp.pop 1024.0
      %v1792 = vmul.f32 %v1790, %v1791
      %vm1793 = vcmask 0
      %1794 = vst.msk [vmem:[#allocation28] sm:$0x1] %vm1793, %v1792
    $region141: #{inversion_plm_mlc_forward.1} parent=1 // pred_fallthru
      _
    // Predicated region
    $region142: #{inversion_plm_mlc_forward.1} parent=1 // pred_check
      _
    $region143: #{inversion_plm_mlc_forward.1} parent=1 // pred_check_branch
      %1796 = sbr.rel (0) target = $region145
    $region144: #{inversion_plm_mlc_forward.1} parent=1 // pred_region
      %s1798 = ssub.s32 128, 128
      %1799 = vsyncadd [#allocation6], %s1798
      %s1801 = sshll.u32 [#allocation27], 4
      %s1802 = int_to_ptr.vmem [resolvable:$true] %s1801
      %1804 = dma.vmem_to_hbm [thread:$0]  %s1802, 128, %s19, [#allocation6]
    $region145: #{inversion_plm_mlc_forward.1} parent=1 // pred_fallthru
      _
    // Predicated region
    $region146: #{inversion_plm_mlc_forward.1} parent=1 // pred_check
      _
    $region147: #{inversion_plm_mlc_forward.1} parent=1 // pred_check_branch
      %1806 = sbr.rel (0) target = $region149
    $region148: #{inversion_plm_mlc_forward.1} parent=1 // pred_region
      %s1808 = ssub.s32 16, 16
      %1809 = vsyncadd [#allocation29], %s1808
      %s1811 = sshll.u32 [#allocation28], 4
      %s1812 = int_to_ptr.vmem [resolvable:$true] %s1811
      %1814 = dma.vmem_to_hbm [thread:$0]  %s1812, 16, %s20, [#allocation29]
    $region149: #{inversion_plm_mlc_forward.1} parent=1 // pred_fallthru
      _
    // Predicated region
    $region150: #{inversion_plm_mlc_forward.1} parent=1 // pred_check
      _
    $region151: #{inversion_plm_mlc_forward.1} parent=1 // pred_check_branch
      %1816 = sbr.rel (0) target = $region153
    $region152: #{inversion_plm_mlc_forward.1} parent=1 // pred_region
      %1817 = dma.done [#allocation6], 128
    $region153: #{inversion_plm_mlc_forward.1} parent=1 // pred_fallthru
      _
    // Predicated region
    $region154: #{inversion_plm_mlc_forward.1} parent=1 // pred_check
      _
    $region155: #{inversion_plm_mlc_forward.1} parent=1 // pred_check_branch
      %1819 = sbr.rel (0) target = $region157
    $region156: #{inversion_plm_mlc_forward.1} parent=1 // pred_region
      %1820 = dma.done [#allocation29], 16
    $region157: #{inversion_plm_mlc_forward.1} parent=1 // pred_fallthru
      _
    %1821 = vsyncpa [#allocation5], 1
    %1822 = vsyncpa [#allocation8], 1
    %1823 = vsyncpa [#allocation11], 1
    %1824 = vsyncpa [#allocation14], 1
    %1825 = vsyncpa [#allocation17], 1
    %1826 = vsyncpa [#allocation20], 1
    %1827 = vsyncpa [#allocation23], 1
    %1828 = vsyncpa [#allocation26], 1
    %1829 = vsyncpa [#allocation6], 1
    %1830 = vsyncpa [#allocation29], 1

</llo_original>
